<compile_context>
chip_gen: v7x
topology: tpu7x:2x2x1
jax: 0.10.0
libtpu: 0.0.40
codegen_flags: <defaults>
</compile_context>

<pallas_src>
import math

import jax
import jax.numpy as jnp
from jax.experimental import pallas as pl
from jax.experimental.pallas import tpu as pltpu


def _round_up(x, m):
    return ((x + m - 1) // m) * m


def _make_kernel(freq_tile, slice_dft):
    """Grid = (row_tiles, freq_tiles); freq is the trailing reduction axis."""
    two_ft = 2 * freq_tile

    def kernel(fp_ref, ft_ref, dft_ref, out_ref):
        j = pl.program_id(1)

        fp = fp_ref[...]            # (TM, K_pad)  bf16
        ft = ft_ref[...]            # (TM, K_pad)  bf16

        # --- first freq step: init accumulator with the Nyquist-bin term ----
        # X[n_fft/2] = sum_n x[n] * (-1)^n  (real)  ->  cheap VPU/XLU reduction
        # hidden under the MXU work; keeps the matmul width at exactly n_fft/2.
        @pl.when(j == 0)
        def _():
            lane = jax.lax.broadcasted_iota(jnp.int32, (1, fp.shape[-1]), 1)
            alt = jnp.where(lane % 2 == 0, 1.0, -1.0).astype(jnp.float32)
            nyq_p = jnp.sum(fp.astype(jnp.float32) * alt, axis=-1, keepdims=True)
            nyq_t = jnp.sum(ft.astype(jnp.float32) * alt, axis=-1, keepdims=True)
            nyq = jnp.sum(jnp.abs(jnp.abs(nyq_p) - jnp.abs(nyq_t)))
            out_ref[...] = jnp.broadcast_to(nyq, out_ref.shape)

        # --- bins [j*freq_tile, (j+1)*freq_tile): one fused [cos | -sin] MXU
        # matmul per input.
        if slice_dft:
            # DFT is fully resident in VMEM; take this tile's columns.
            col0 = pl.multiple_of(j * two_ft, two_ft)
            d = dft_ref[:, pl.ds(col0, two_ft)]
        else:
            d = dft_ref[...]        # (K_pad, 2*freq_tile) streamed per step

        xp = jnp.dot(fp, d, preferred_element_type=jnp.float32)   # (TM, 2ft)
        xt = jnp.dot(ft, d, preferred_element_type=jnp.float32)

        re_p, im_p = xp[:, :freq_tile], xp[:, freq_tile:]
        re_t, im_t = xt[:, :freq_tile], xt[:, freq_tile:]

        mag_p = jnp.sqrt(re_p * re_p + im_p * im_p)
        mag_t = jnp.sqrt(re_t * re_t + im_t * im_t)

        partial = jnp.sum(jnp.abs(mag_p - mag_t))
        # Accumulate per-row-tile partial sum into the aligned (1, 8, 128)
        # output block; the wrapper reads element [i, 0, 0].
        out_ref[...] += jnp.broadcast_to(partial, out_ref.shape)

    return kernel


def _frame_signal(x2d, n_fft, hop_length):
    """x2d: (S, L) -> frames (S, n_frames, n_fft), torch.stft center=True style."""
    pad = n_fft // 2
    xp = jnp.pad(x2d, ((0, 0), (pad, pad)), mode="reflect")
    L = x2d.shape[-1]
    n_frames = 1 + L // hop_length
    idx = jnp.arange(n_frames)[:, None] * hop_length + jnp.arange(n_fft)[None, :]
    return xp[:, idx], n_frames   # (S, n_frames, n_fft)


def harmonic_loss(pred, target, *, sample_rate=44100, n_fft=2048, hop_length=512,
                  freq_tile=256, row_tile=512):
    """JAX/Pallas equivalent of HarmonicLoss.forward (returns a scalar)."""
    del sample_rate  # unused by the forward pass, kept for signature parity
    assert n_fft % 2 == 0 and row_tile % 16 == 0

    L = pred.shape[-1]
    pred2d = pred.reshape(-1, L).astype(jnp.float32)
    target2d = target.reshape(-1, L).astype(jnp.float32)

    frames_p, n_frames = _frame_signal(pred2d, n_fft, hop_length)
    frames_t, _ = _frame_signal(target2d, n_fft, hop_length)

    S = pred2d.shape[0]
    N = S * n_frames                       # true number of frames (rows)
    frames_p = frames_p.reshape(N, n_fft)
    frames_t = frames_t.reshape(N, n_fft)

    # --- frequency split: bins 0..n_fft/2-1 on the MXU, Nyquist on the VPU ---
    F_mm = n_fft // 2                      # matmul bins (multiple of 128)
    F_true = F_mm + 1                      # onesided STFT bin count
    freq_tile = min(freq_tile, F_mm)
    assert freq_tile % 128 == 0 and F_mm % freq_tile == 0
    n_freq_tiles = F_mm // freq_tile

    # --- padding for TPU tiling ----------------------------------------------
    K_pad = _round_up(n_fft, 128)          # contraction dim, lane-aligned
    tm = min(row_tile, _round_up(N, 16))   # row tile (bf16 sublane-aligned)
    N_pad = _round_up(N, tm)
    n_row_tiles = N_pad // tm

    # Zero rows/cols contribute 0 to the L1 sum, so padding is harmless.
    frames_p = jnp.pad(frames_p, ((0, N_pad - N), (0, K_pad - n_fft)))
    frames_t = jnp.pad(frames_t, ((0, N_pad - N), (0, K_pad - n_fft)))
    frames_p = frames_p.astype(jnp.bfloat16)
    frames_t = frames_t.astype(jnp.bfloat16)

    # --- fused one-sided DFT: per freq tile the columns are [cos | -sin] -----
    n = jnp.arange(n_fft, dtype=jnp.float32)[:, None]
    k = jnp.arange(F_mm, dtype=jnp.float32)[None, :]
    ang = (2.0 * math.pi / float(n_fft)) * n * k
    cos_m = jnp.cos(ang).reshape(n_fft, n_freq_tiles, freq_tile)
    sin_m = (-jnp.sin(ang)).reshape(n_fft, n_freq_tiles, freq_tile)
    dft = jnp.concatenate([cos_m, sin_m], axis=-1)               # (n_fft, nt, 2ft)
    dft = dft.reshape(n_fft, n_freq_tiles * 2 * freq_tile)
    dft = jnp.pad(dft, ((0, K_pad - n_fft), (0, 0))).astype(jnp.bfloat16)

    # Keep the whole DFT resident in VMEM (constant block index -> DMA'd once)
    # when it fits; otherwise stream one freq tile per step.
    dft_bytes = dft.shape[0] * dft.shape[1] * 2
    resident = (dft_bytes <= 12 * 1024 * 1024) or n_freq_tiles == 1
    slice_dft = resident and n_freq_tiles > 1
    if resident:
        dft_spec = pl.BlockSpec((K_pad, n_freq_tiles * 2 * freq_tile),
                                lambda i, j: (0, 0))
    else:
        dft_spec = pl.BlockSpec((K_pad, 2 * freq_tile), lambda i, j: (0, j))

    grid = (n_row_tiles, n_freq_tiles)
    partials = pl.pallas_call(
        _make_kernel(freq_tile, slice_dft),
        out_shape=jax.ShapeDtypeStruct((n_row_tiles, 8, 128), jnp.float32),
        grid_spec=pltpu.PrefetchScalarGridSpec(
            num_scalar_prefetch=0,
            grid=grid,
            in_specs=[
                pl.BlockSpec((tm, K_pad), lambda i, j: (i, 0)),
                pl.BlockSpec((tm, K_pad), lambda i, j: (i, 0)),
                dft_spec,
            ],
            out_specs=pl.BlockSpec((1, 8, 128), lambda i, j: (i, 0, 0)),
        ),
        compiler_params=pltpu.CompilerParams(
            dimension_semantics=("parallel", "arbitrary"),
            vmem_limit_bytes=48 * 1024 * 1024,
        ),
    )(frames_p, frames_t, dft)

    total = jnp.sum(partials[:, 0, 0])
    count = N * F_true        # elements of the (S, F_true, n_frames) magnitude
    return (total / count).astype(jnp.float32)


def _reference_loss(pred, target, n_fft, hop_length):
    """Pure-JAX reference (same math, via rfft) for a sanity check."""
    L = pred.shape[-1]
    fp, _ = _frame_signal(pred.reshape(-1, L).astype(jnp.float32), n_fft, hop_length)
    ft, _ = _frame_signal(target.reshape(-1, L).astype(jnp.float32), n_fft, hop_length)
    mp = jnp.abs(jnp.fft.rfft(fp, n=n_fft, axis=-1))
    mt = jnp.abs(jnp.fft.rfft(ft, n=n_fft, axis=-1))
    return jnp.mean(jnp.abs(mp - mt))


if __name__ == "__main__":
    # Small, module-consistent shapes: pred/target (B=2, C=4, L=2048) audio with
    # a small STFT config (n_fft=512, hop=128) -> 17 frames, 257 freq bins.
    # freq_tile=128 / row_tile=64 force a (3, 2) grid so the multi-row-tile
    # accumulation, freq reduction and resident-DFT slicing paths are exercised.
    key = jax.random.PRNGKey(0)
    k1, k2 = jax.random.split(key)
    B, C, L = 2, 4, 2048
    n_fft, hop = 512, 128
    pred = jax.random.normal(k1, (B, C, L), dtype=jnp.float32)
    target = jax.random.normal(k2, (B, C, L), dtype=jnp.float32)

    loss = harmonic_loss(pred, target, n_fft=n_fft, hop_length=hop,
                         freq_tile=128, row_tile=64)
    loss = jax.block_until_ready(loss)

    ref = jax.block_until_ready(_reference_loss(pred, target, n_fft, hop))
    # bf16 MXU operands (f32 accumulation) -> slightly looser tolerance.
    assert jnp.allclose(loss, ref, rtol=3e-3, atol=3e-3), (loss, ref)

    print("KERNEL_OK")
</pallas_src>

<mosaic_0001>
module attributes {stable_mosaic.version = 11 : i64} {
  func.func @kernel(%arg0: i32, %arg1: i32, %arg2: memref<64x512xbf16, #tpu.memory_space<vmem>>, %arg3: memref<64x512xbf16, #tpu.memory_space<vmem>>, %arg4: memref<512x512xbf16, #tpu.memory_space<vmem>>, %arg5: memref<1x8x128xf32, #tpu.memory_space<vmem>>) attributes {dimension_semantics = [#tpu.dimension_semantics<parallel>, #tpu.dimension_semantics<arbitrary>], iteration_bounds = array<i64: 3, 2>, scalar_prefetch = 0 : i64, scratch_operands = 0 : i64, tpu.core_type = #tpu.core_type<tc>, window_params = [{transform_indices = @transform_0, window_bounds = array<i64: 64, 512>}, {transform_indices = @transform_1, window_bounds = array<i64: 64, 512>}, {pipeline_mode = #tpu.pipeline_mode<synchronous>, transform_indices = @transform_2, window_bounds = array<i64: 512, 512>}, {transform_indices = @transform_3, window_bounds = array<i64: 1, 8, 128>}]} {
    %c0 = arith.constant 0 : index
    %c0_0 = arith.constant 0 : index
    %0 = vector.load %arg2[%c0, %c0_0] : memref<64x512xbf16, #tpu.memory_space<vmem>>, vector<64x512xbf16>
    %c0_1 = arith.constant 0 : index
    %c0_2 = arith.constant 0 : index
    %1 = vector.load %arg3[%c0_1, %c0_2] : memref<64x512xbf16, #tpu.memory_space<vmem>>, vector<64x512xbf16>
    %c0_i32 = arith.constant 0 : i32
    %2 = arith.cmpi eq, %arg1, %c0_i32 : i32
    %3 = arith.extui %2 : i1 to i32
    %c0_i32_3 = arith.constant 0 : i32
    %4 = arith.cmpi ne, %3, %c0_i32_3 : i32
    scf.if %4 {
      %33 = tpu.iota {dimensions = array<i32: 1>} : vector<1x512xi32>
      %c2_i32 = arith.constant 2 : i32
      %c0_i32_13 = arith.constant 0 : i32
      %34 = arith.cmpi eq, %c2_i32, %c0_i32_13 : i32
      %c1_i32 = arith.constant 1 : i32
      %35 = arith.select %34, %c1_i32, %c2_i32 : i32
      %36 = vector.broadcast %35 : i32 to vector<1x512xi32>
      %37 = arith.remsi %33, %36 : vector<1x512xi32>
      %c0_i32_14 = arith.constant 0 : i32
      %38 = vector.broadcast %c0_i32_14 : i32 to vector<1x512xi32>
      %39 = arith.cmpi ne, %37, %38 : vector<1x512xi32>
      %c0_i32_15 = arith.constant 0 : i32
      %40 = vector.broadcast %c0_i32_15 : i32 to vector<1x512xi32>
      %41 = arith.cmpi slt, %37, %40 : vector<1x512xi32>
      %c0_i32_16 = arith.constant 0 : i32
      %42 = arith.cmpi slt, %35, %c0_i32_16 : i32
      %43 = vector.broadcast %42 : i1 to vector<1x512xi1>
      %44 = vector.broadcast %43 : vector<1x512xi1> to vector<1x512xi1>
      %45 = arith.xori %41, %44 : vector<1x512xi1>
      %46 = arith.andi %45, %39 : vector<1x512xi1>
      %47 = vector.broadcast %35 : i32 to vector<1x512xi32>
      %48 = arith.addi %37, %47 : vector<1x512xi32>
      %49 = arith.select %46, %48, %37 : vector<1x512xi1>, vector<1x512xi32>
      %c0_i32_17 = arith.constant 0 : i32
      %50 = vector.broadcast %c0_i32_17 : i32 to vector<1x512xi32>
      %51 = arith.cmpi eq, %49, %50 : vector<1x512xi32>
      %cst_18 = arith.constant 1.000000e+00 : f32
      %cst_19 = arith.constant -1.000000e+00 : f32
      %52 = vector.broadcast %cst_18 : f32 to vector<1x512xf32>
      %53 = vector.broadcast %cst_19 : f32 to vector<1x512xf32>
      %54 = arith.select %51, %52, %53 : vector<1x512xi1>, vector<1x512xf32>
      %55 = arith.extf %0 : vector<64x512xbf16> to vector<64x512xf32>
      %56 = vector.broadcast %54 : vector<1x512xf32> to vector<64x512xf32>
      %57 = arith.mulf %55, %56 : vector<64x512xf32>
      %cst_20 = arith.constant dense<0.000000e+00> : vector<64xf32>
      %58 = vector.multi_reduction <add>, %57, %cst_20 [1] : vector<64x512xf32> to vector<64xf32>
      %59 = vector.shape_cast %58 : vector<64xf32> to vector<64x1xf32>
      %60 = arith.extf %1 : vector<64x512xbf16> to vector<64x512xf32>
      %61 = vector.broadcast %54 : vector<1x512xf32> to vector<64x512xf32>
      %62 = arith.mulf %60, %61 : vector<64x512xf32>
      %cst_21 = arith.constant dense<0.000000e+00> : vector<64xf32>
      %63 = vector.multi_reduction <add>, %62, %cst_21 [1] : vector<64x512xf32> to vector<64xf32>
      %64 = vector.shape_cast %63 : vector<64xf32> to vector<64x1xf32>
      %65 = math.absf %59 : vector<64x1xf32>
      %66 = math.absf %64 : vector<64x1xf32>
      %67 = arith.subf %65, %66 : vector<64x1xf32>
      %68 = math.absf %67 : vector<64x1xf32>
      %69 = vector.shape_cast %68 : vector<64x1xf32> to vector<1x64x1xf32>
      %cst_22 = arith.constant dense<0.000000e+00> : vector<1xf32>
      %70 = vector.multi_reduction <add>, %69, %cst_22 [1, 2] : vector<1x64x1xf32> to vector<1xf32>
      %71 = vector.shape_cast %70 : vector<1xf32> to vector<1x1x1xf32>
      %72 = vector.extract %71[0, 0, 0] : f32 from vector<1x1x1xf32>
      %73 = vector.broadcast %72 : f32 to vector<1x8x128xf32>
      %c0_23 = arith.constant 0 : index
      %c0_24 = arith.constant 0 : index
      %c0_25 = arith.constant 0 : index
      %74 = vector.load %arg5[%c0_23, %c0_24, %c0_25] : memref<1x8x128xf32, #tpu.memory_space<vmem>>, vector<1x8x128xf32>
      tpu.vector_store %arg5[%c0_23, %c0_24, %c0_25], %73 {strides = array<i32>} : memref<1x8x128xf32, #tpu.memory_space<vmem>>, vector<1x8x128xf32>,
    } else {
    }
    %c256_i32 = arith.constant 256 : i32
    %5 = arith.muli %arg1, %c256_i32 : i32
    %6 = tpu.assume_multiple %5, 256 : i32
    %c0_4 = arith.constant 0 : index
    %7 = arith.index_cast %6 : i32 to index
    %8 = vector.load %arg4[%c0_4, %7] : memref<512x512xbf16, #tpu.memory_space<vmem>>, vector<512x256xbf16>
    %cst = arith.constant dense<0.000000e+00> : vector<64x256xf32>
    %9 = tpu.matmul %0, %8, %cst {dimension_numbers = #tpu.dot_dimension_numbers<[1], [0], [0], [1], [0, 0, 1, 1], [], []>} : vector<64x512xbf16>, vector<512x256xbf16>, vector<64x256xf32> -> vector<64x256xf32>
    %cst_5 = arith.constant dense<0.000000e+00> : vector<64x256xf32>
    %10 = tpu.matmul %1, %8, %cst_5 {dimension_numbers = #tpu.dot_dimension_numbers<[1], [0], [0], [1], [0, 0, 1, 1], [], []>} : vector<64x512xbf16>, vector<512x256xbf16>, vector<64x256xf32> -> vector<64x256xf32>
    %11 = vector.extract_strided_slice %9 {offsets = [0, 0], sizes = [64, 128], strides = [1, 1]} : vector<64x256xf32> to vector<64x128xf32>
    %12 = vector.extract_strided_slice %9 {offsets = [0, 128], sizes = [64, 128], strides = [1, 1]} : vector<64x256xf32> to vector<64x128xf32>
    %13 = vector.extract_strided_slice %10 {offsets = [0, 0], sizes = [64, 128], strides = [1, 1]} : vector<64x256xf32> to vector<64x128xf32>
    %14 = vector.extract_strided_slice %10 {offsets = [0, 128], sizes = [64, 128], strides = [1, 1]} : vector<64x256xf32> to vector<64x128xf32>
    %15 = arith.mulf %11, %11 : vector<64x128xf32>
    %16 = arith.mulf %12, %12 : vector<64x128xf32>
    %17 = arith.addf %15, %16 : vector<64x128xf32>
    %18 = math.sqrt %17 : vector<64x128xf32>
    %19 = arith.mulf %13, %13 : vector<64x128xf32>
    %20 = arith.mulf %14, %14 : vector<64x128xf32>
    %21 = arith.addf %19, %20 : vector<64x128xf32>
    %22 = math.sqrt %21 : vector<64x128xf32>
    %23 = arith.subf %18, %22 : vector<64x128xf32>
    %24 = math.absf %23 : vector<64x128xf32>
    %25 = vector.shape_cast %24 : vector<64x128xf32> to vector<1x64x128xf32>
    %cst_6 = arith.constant dense<0.000000e+00> : vector<1xf32>
    %26 = vector.multi_reduction <add>, %25, %cst_6 [1, 2] : vector<1x64x128xf32> to vector<1xf32>
    %27 = vector.shape_cast %26 : vector<1xf32> to vector<1x1x1xf32>
    %28 = vector.extract %27[0, 0, 0] : f32 from vector<1x1x1xf32>
    %c0_7 = arith.constant 0 : index
    %c0_8 = arith.constant 0 : index
    %c0_9 = arith.constant 0 : index
    %29 = vector.load %arg5[%c0_7, %c0_8, %c0_9] : memref<1x8x128xf32, #tpu.memory_space<vmem>>, vector<1x8x128xf32>
    %30 = vector.broadcast %28 : f32 to vector<1x8x128xf32>
    %31 = arith.addf %29, %30 : vector<1x8x128xf32>
    %c0_10 = arith.constant 0 : index
    %c0_11 = arith.constant 0 : index
    %c0_12 = arith.constant 0 : index
    %32 = vector.load %arg5[%c0_10, %c0_11, %c0_12] : memref<1x8x128xf32, #tpu.memory_space<vmem>>, vector<1x8x128xf32>
    tpu.vector_store %arg5[%c0_10, %c0_11, %c0_12], %31 {strides = array<i32>} : memref<1x8x128xf32, #tpu.memory_space<vmem>>, vector<1x8x128xf32>,
    return
  }
  func.func @transform_0(%arg0: i32, %arg1: i32) -> (i32, i32) {
    %c0_i32 = arith.constant 0 : i32
    %c0_i32_0 = arith.constant 0 : i32
    return %arg0, %c0_i32 : i32, i32
  }
  func.func @transform_1(%arg0: i32, %arg1: i32) -> (i32, i32) {
    %c0_i32 = arith.constant 0 : i32
    %c0_i32_0 = arith.constant 0 : i32
    return %arg0, %c0_i32 : i32, i32
  }
  func.func @transform_2(%arg0: i32, %arg1: i32) -> (i32, i32) {
    %c0_i32 = arith.constant 0 : i32
    %c0_i32_0 = arith.constant 0 : i32
    %c0_i32_1 = arith.constant 0 : i32
    return %c0_i32, %c0_i32_0 : i32, i32
  }
  func.func @transform_3(%arg0: i32, %arg1: i32) -> (i32, i32, i32) {
    %c0_i32 = arith.constant 0 : i32
    %c0_i32_0 = arith.constant 0 : i32
    %c0_i32_1 = arith.constant 0 : i32
    return %arg0, %c0_i32, %c0_i32_0 : i32, i32, i32
  }
}

</mosaic_0001>

<llo_original>
// kernel: tpu_custom_call.1
$region0: #{tpu_custom_call.1}
  #allocation0 [shape = 'u32[]', space=smem, size = 0x4, offset = 0x4, fixed_abs, tag = 'smem constant byte address 0x4 - core index']
  #allocation1 [shape = 'u32[144,128]{1,0:T(1,128)}', space=vmem, size = 0x12000, scoped, tag = 'internal scratch']
  %s0 = inlined_call_operand.hbm [shape: bf16[192,512], index: 0, kind: input, shape index: {}]
  %s1 = inlined_call_operand.hbm [shape: bf16[192,512], index: 1, kind: input, shape index: {}]
  %s2 = inlined_call_operand.hbm [shape: bf16[512,512], index: 2, kind: input, shape index: {}]
  %s3 = inlined_call_operand.hbm [shape: f32[3,8,128], index: 3, kind: output, shape index: {}]
  %s4 = sld [smem:[#allocation0]]
  $region61: #{tpu_custom_call.1} parent=0
    _
  %s6 = ssub.s32 1, %s4
  %s7 = scalar_select 0, %s6, %s4
  $region1: #{tpu_custom_call.1} parent=0
    #allocation2 [shape = 'u8[131072]{0}', space=vmem, size = 0x20000, scoped, tag = 'input window, operand 0']
    #allocation3 [shape = 's32[2]{0}', space=sflag, size = 0x8, scoped, tag = 'scoped memory for tpu_custom_call.1']
    #allocation4 [shape = 's32[2]{0}', space=sflag, size = 0x8, scoped, tag = 'scoped memory for tpu_custom_call.1']
    #allocation5 [shape = 'u8[131072]{0}', space=vmem, size = 0x20000, scoped, tag = 'input window, operand 1']
    #allocation6 [shape = 's32[2]{0}', space=sflag, size = 0x8, scoped, tag = 'scoped memory for tpu_custom_call.1']
    #allocation7 [shape = 'u8[524288]{0}', space=vmem, size = 0x80000, scoped, tag = 'input window, operand 2, single buffered']
    #allocation8 [shape = 'u8[8192]{0}', space=vmem, size = 0x2000, scoped, tag = 'output window, operand 0']
    %8 = vsyncpa [#allocation3], 0
    %s9 = scalar_lea.sflag [#allocation3], 1
    %10 = vsyncpa %s9, 0
    %11 = vsyncpa [#allocation6], 0
    %s12 = scalar_lea.sflag [#allocation6], 1
    %13 = vsyncpa %s12, 0
    %14 = vsyncpa [#allocation4], 0
    %s15 = scalar_lea.sflag [#allocation4], 1
    %16 = vsyncpa %s15, 0
    loop: start=0, step=1, limit=8
    $region2: #{tpu_custom_call.1} parent=1 // loop_pre_header
      _
    $region3: #{tpu_custom_call.1} parent=1 // loop_header
      %s18 = sphi 0, %s22
      %p19 = scmp.ge.s32.totalorder %s18, 8
      %s25 = sphi 0, %s37
      %s26 = sphi 0, %s33
      %s27 = sphi 0, %s25
      %s28 = sphi 0, %s26
      %s29 = sphi 0, %s27
      %s30 = sphi 0, %s28
      %s40 = sphi 0, %s42
      %s43 = sphi 0, %s40
      %s44 = sphi 0, %s43
      %s60 = sphi 0, %s44
      %s66 = sphi 0, %s68
      %s69 = sphi 0, %s66
      %s70 = sphi 0, %s69
      %s86 = sphi 0, %s70
      %s90 = sphi 0, %s90
      %s92 = sphi 0, %s90
      %s93 = sphi 0, %s92
      %s107 = sphi 0, %s93
      %s113 = sphi 0, %s115
      %s116 = sphi 0, %s113
      %s117 = sphi 0, %s116
      %s133 = sphi 0, %s117
    $region4: #{tpu_custom_call.1} parent=1 // loop_header_branch
      %21 = sbr.rel (%p19) target = $region8
    $region5: #{tpu_custom_call.1} parent=1 // loop_body
      %s23 = ssub.s32 %s18, 1
      %s24 = ssub.s32 %s18, 2
      %s31 = sadd.s32 1, %s26
      %p32 = scmp.ge.s32.totalorder %s31, 2
      %s33 = scalar_select %p32, 0, %s31
      %s34 = sadd.s32 1, %s25
      %s35 = scalar_select %p32, %s34, %s25
      %p36 = scmp.ge.s32.totalorder %s35, 3
      %s37 = scalar_select %p36, 0, %s35
      %s38 = ssub.s32 %s25, %s37
      %p39 = scmp.eq.s32.totalorder %s38, 0
      %s41 = sadd.s32 %s40, 1
      %s42 = scalar_select %p39, %s40, %s41
      %p45 = pneg %p39
      %p46 = scmp.eq.s32.totalorder %s18, 5
      %p47 = por %p45, %p46
      %p48 = scmp.ne.s32.totalorder %s40, %s43
      %p49 = scmp.eq.s32.totalorder %s18, 0
      %p50 = por %p48, %p49
      %p51 = scmp.ne.s32.totalorder %s40, %s43
      %p52 = scmp.eq.s32.totalorder %s23, 5
      %p53 = por %p51, %p52
      %p54 = scmp.ne.s32.totalorder %s43, %s44
      %p55 = scmp.eq.s32.totalorder %s23, 0
      %p56 = por %p54, %p55
      %p57 = scmp.ne.s32.totalorder %s43, %s44
      %p58 = scmp.eq.s32.totalorder %s24, 5
      %p59 = por %p57, %p58
      %p61 = scmp.ne.s32.totalorder %s44, %s60
      %p62 = scmp.eq.s32.totalorder %s24, 0
      %p63 = por %p61, %p62
      %s64 = ssub.s32 %s25, %s37
      %p65 = scmp.eq.s32.totalorder %s64, 0
      %s67 = sadd.s32 %s66, 1
      %s68 = scalar_select %p65, %s66, %s67
      %p71 = pneg %p65
      %p72 = scmp.eq.s32.totalorder %s18, 5
      %p73 = por %p71, %p72
      %p74 = scmp.ne.s32.totalorder %s66, %s69
      %p75 = scmp.eq.s32.totalorder %s18, 0
      %p76 = por %p74, %p75
      %p77 = scmp.ne.s32.totalorder %s66, %s69
      %p78 = scmp.eq.s32.totalorder %s23, 5
      %p79 = por %p77, %p78
      %p80 = scmp.ne.s32.totalorder %s69, %s70
      %p81 = scmp.eq.s32.totalorder %s23, 0
      %p82 = por %p80, %p81
      %p83 = scmp.ne.s32.totalorder %s69, %s70
      %p84 = scmp.eq.s32.totalorder %s24, 5
      %p85 = por %p83, %p84
      %p87 = scmp.ne.s32.totalorder %s70, %s86
      %p88 = scmp.eq.s32.totalorder %s24, 0
      %p89 = por %p87, %p88
      %s91 = sadd.s32 %s90, 1
      %p94 = scmp.eq.s32.totalorder %s18, 5
      %p95 = scmp.ne.s32.totalorder %s90, %s92
      %p96 = scmp.eq.s32.totalorder %s18, 0
      %p97 = por %p95, %p96
      %p98 = scmp.ne.s32.totalorder %s90, %s92
      %p99 = scmp.eq.s32.totalorder %s23, 5
      %p100 = por %p98, %p99
      %p101 = scmp.ne.s32.totalorder %s92, %s93
      %p102 = scmp.eq.s32.totalorder %s23, 0
      %p103 = por %p101, %p102
      %p104 = scmp.ne.s32.totalorder %s92, %s93
      %p105 = scmp.eq.s32.totalorder %s24, 5
      %p106 = por %p104, %p105
      %p108 = scmp.ne.s32.totalorder %s93, %s107
      %p109 = scmp.eq.s32.totalorder %s24, 0
      %p110 = por %p108, %p109
      %s111 = ssub.s32 %s25, %s37
      %p112 = scmp.eq.s32.totalorder %s111, 0
      %s114 = sadd.s32 %s113, 1
      %s115 = scalar_select %p112, %s113, %s114
      %p118 = pneg %p112
      %p119 = scmp.eq.s32.totalorder %s18, 5
      %p120 = por %p118, %p119
      %p121 = scmp.ne.s32.totalorder %s113, %s116
      %p122 = scmp.eq.s32.totalorder %s18, 0
      %p123 = por %p121, %p122
      %p124 = scmp.ne.s32.totalorder %s113, %s116
      %p125 = scmp.eq.s32.totalorder %s23, 5
      %p126 = por %p124, %p125
      %p127 = scmp.ne.s32.totalorder %s116, %s117
      %p128 = scmp.eq.s32.totalorder %s23, 0
      %p129 = por %p127, %p128
      %p130 = scmp.ne.s32.totalorder %s116, %s117
      %p131 = scmp.eq.s32.totalorder %s24, 5
      %p132 = por %p130, %p131
      %p134 = scmp.ne.s32.totalorder %s117, %s133
      %p135 = scmp.eq.s32.totalorder %s24, 0
      %p136 = por %p134, %p135
      %p137 = scmp.le.s32.totalorder 1, %s18
      %p138 = scmp.lt.s32.totalorder %s18, 7
      %p139 = pnand %p137, %p138
      %p140 = pneg %p139
      // Predicated region
      $region9: #{tpu_custom_call.1} parent=5 // pred_check
        _
      $region10: #{tpu_custom_call.1} parent=5 // pred_check_branch
        %142 = sbr.rel (%p139) target = $region12
      $region11: #{tpu_custom_call.1} parent=5 // pred_region
        %s143 = ssub.s32 %s18, 1
        // Predicated region
        $region13: #{tpu_custom_call.1} parent=11 // pred_check
          %p144 = pneg %p103
        $region14: #{tpu_custom_call.1} parent=11 // pred_check_branch
          %146 = sbr.rel (%p144) target = $region16
        $region15: #{tpu_custom_call.1} parent=11 // pred_region
          %s148 = ssub.s32 16384, 16384
          %149 = vsyncadd [#allocation6], %s148
          %s150 = sshll.u32 [#allocation7], 4
          %s151 = int_to_ptr.vmem [resolvable:$true] %s150
          %156 = dma.hbm_to_vmem [thread:$0]  %s2, 16384, %s151, [#allocation6], 256, 256, 16
        $region16: #{tpu_custom_call.1} parent=11 // pred_fallthru
          _
      $region12: #{tpu_custom_call.1} parent=5 // pred_fallthru
        _
      %p157 = scmp.lt.s32.totalorder %s18, 6
      // Predicated region
      $region17: #{tpu_custom_call.1} parent=5 // pred_check
        %p158 = pneg %p157
      $region18: #{tpu_custom_call.1} parent=5 // pred_check_branch
        %160 = sbr.rel (%p158) target = $region20
      $region19: #{tpu_custom_call.1} parent=5 // pred_region
        // Predicated region
        $region21: #{tpu_custom_call.1} parent=19 // pred_check
          %p161 = pneg %p50
        $region22: #{tpu_custom_call.1} parent=19 // pred_check_branch
          %163 = sbr.rel (%p161) target = $region24
        $region23: #{tpu_custom_call.1} parent=19 // pred_region
          %s164 = sand.u32 %s40, 1
          %s165 = scalar_lea.sflag [#allocation3], %s164
          %s166 = sand.u32 %s40, 1
          %s167 = smul.addr %s166, 128
          %s168 = scalar_lea.vmem [#allocation2], %s167
          %s169 = smul.u32 8, %s25
          %s171 = ssub.s32 2048, 2048
          %172 = vsyncadd %s165, %s171
          %s173 = smul.addr %s169, 4
          %s174 = smul.addr %s173, 64
          %s175 = scalar_lea.hbm %s0, %s174
          %s176 = sshll.u32 %s168, 4
          %s177 = int_to_ptr.vmem [resolvable:$true] %s176
          %182 = dma.hbm_to_vmem [thread:$0]  %s175, 2048, %s177, %s165, 256, 256, 16
        $region24: #{tpu_custom_call.1} parent=19 // pred_fallthru
          _
        // Predicated region
        $region25: #{tpu_custom_call.1} parent=19 // pred_check
          %p183 = pneg %p76
        $region26: #{tpu_custom_call.1} parent=19 // pred_check_branch
          %185 = sbr.rel (%p183) target = $region28
        $region27: #{tpu_custom_call.1} parent=19 // pred_region
          %s186 = sand.u32 %s18, 1
          %s187 = scalar_lea.sflag [#allocation6], %s186
          %s188 = sand.u32 %s66, 1
          %s189 = smul.addr %s188, 128
          %s190 = scalar_lea.vmem [#allocation5], %s189
          %s191 = smul.u32 8, %s25
          %s193 = ssub.s32 2048, 2048
          %194 = vsyncadd %s187, %s193
          %s195 = smul.addr %s191, 4
          %s196 = smul.addr %s195, 64
          %s197 = scalar_lea.hbm %s1, %s196
          %s198 = sshll.u32 %s190, 4
          %s199 = int_to_ptr.vmem [resolvable:$true] %s198
          %204 = dma.hbm_to_vmem [thread:$0]  %s197, 2048, %s199, %s187, 256, 256, 16
        $region28: #{tpu_custom_call.1} parent=19 // pred_fallthru
          _
      $region20: #{tpu_custom_call.1} parent=5 // pred_fallthru
        _
      %p205 = scmp.le.s32.totalorder 1, %s18
      %p206 = scmp.lt.s32.totalorder %s18, 7
      %p207 = pnand %p205, %p206
      %p208 = pneg %p207
      // Predicated region
      $region29: #{tpu_custom_call.1} parent=5 // pred_check
        _
      $region30: #{tpu_custom_call.1} parent=5 // pred_check_branch
        %210 = sbr.rel (%p207) target = $region32
      $region31: #{tpu_custom_call.1} parent=5 // pred_region
        %s211 = ssub.s32 %s18, 1
        %s212 = sand.u32 %s43, 1
        %s213 = scalar_lea.sflag [#allocation3], %s212
        %s214 = sand.u32 %s43, 1
        %s215 = smul.addr %s214, 128
        %s216 = scalar_lea.vmem [#allocation2], %s215
        // Predicated region
        $region33: #{tpu_custom_call.1} parent=31 // pred_check
          %p217 = pneg %p56
        $region34: #{tpu_custom_call.1} parent=31 // pred_check_branch
          %219 = sbr.rel (%p217) target = $region36
        $region35: #{tpu_custom_call.1} parent=31 // pred_region
          %220 = dma.done %s213, 2048
        $region36: #{tpu_custom_call.1} parent=31 // pred_fallthru
          _
        %s221 = sand.u32 %s23, 1
        %s222 = scalar_lea.sflag [#allocation6], %s221
        %s223 = sand.u32 %s69, 1
        %s224 = smul.addr %s223, 128
        %s225 = scalar_lea.vmem [#allocation5], %s224
        // Predicated region
        $region37: #{tpu_custom_call.1} parent=31 // pred_check
          %p226 = pneg %p82
        $region38: #{tpu_custom_call.1} parent=31 // pred_check_branch
          %228 = sbr.rel (%p226) target = $region40
        $region39: #{tpu_custom_call.1} parent=31 // pred_region
          %229 = dma.done %s222, 2048
        $region40: #{tpu_custom_call.1} parent=31 // pred_fallthru
          _
        // Predicated region
        $region41: #{tpu_custom_call.1} parent=31 // pred_check
          %p230 = pneg %p103
        $region42: #{tpu_custom_call.1} parent=31 // pred_check_branch
          %232 = sbr.rel (%p230) target = $region44
        $region43: #{tpu_custom_call.1} parent=31 // pred_region
          %233 = dma.done [#allocation6], 16384
        $region44: #{tpu_custom_call.1} parent=31 // pred_fallthru
          _
        %s234 = sand.u32 %s43, 1
        %s235 = scalar_lea.sflag [#allocation3], %s234
        %s236 = sand.u32 %s43, 1
        %s237 = smul.addr %s236, 128
        %s238 = scalar_lea.vmem [#allocation2], %s237
        %p239 = pneg %p56
        %p240 = pneg %p53
        %s241 = sand.u32 %s23, 1
        %s242 = scalar_lea.sflag [#allocation6], %s241
        %s243 = sand.u32 %s69, 1
        %s244 = smul.addr %s243, 128
        %s245 = scalar_lea.vmem [#allocation5], %s244
        %p246 = pneg %p82
        %p247 = pneg %p79
        %p248 = pneg %p103
        %p249 = pneg %p100
        %p250 = pneg %p129
        %p251 = pneg %p126
        %s252 = sand.u32 %s116, 1
        %s253 = scalar_lea.sflag [#allocation4], %s252
        %s254 = sand.u32 %s116, 1
        %s255 = smul.addr %s254, 8
        %s256 = scalar_lea.vmem [#allocation8], %s255
        %s257 = smul.u32 8, %s27
        %s258 = smul.u32 8, %s27
        %v259 = vld [vmem:[%s216] sm:$0xff]
        %v260 = vld [vmem:[%s216 + $0x8] sm:$0xff]
        %v261 = vld [vmem:[%s216 + $0x10] sm:$0xff]
        %v262 = vld [vmem:[%s216 + $0x18] sm:$0xff]
        %v263 = vld [vmem:[%s216 + $0x20] sm:$0xff]
        %v264 = vld [vmem:[%s216 + $0x28] sm:$0xff]
        %v265 = vld [vmem:[%s216 + $0x30] sm:$0xff]
        %v266 = vld [vmem:[%s216 + $0x38] sm:$0xff]
        %v267 = vld [vmem:[%s216 + $0x40] sm:$0xff]
        %v268 = vld [vmem:[%s216 + $0x48] sm:$0xff]
        %v269 = vld [vmem:[%s216 + $0x50] sm:$0xff]
        %v270 = vld [vmem:[%s216 + $0x58] sm:$0xff]
        %v271 = vld [vmem:[%s216 + $0x60] sm:$0xff]
        %v272 = vld [vmem:[%s216 + $0x68] sm:$0xff]
        %v273 = vld [vmem:[%s216 + $0x70] sm:$0xff]
        %v274 = vld [vmem:[%s216 + $0x78] sm:$0xff]
        %v275 = vld [vmem:[%s225] sm:$0xff]
        %v276 = vld [vmem:[%s225 + $0x8] sm:$0xff]
        %v277 = vld [vmem:[%s225 + $0x10] sm:$0xff]
        %v278 = vld [vmem:[%s225 + $0x18] sm:$0xff]
        %v279 = vld [vmem:[%s225 + $0x20] sm:$0xff]
        %v280 = vld [vmem:[%s225 + $0x28] sm:$0xff]
        %v281 = vld [vmem:[%s225 + $0x30] sm:$0xff]
        %v282 = vld [vmem:[%s225 + $0x38] sm:$0xff]
        %v283 = vld [vmem:[%s225 + $0x40] sm:$0xff]
        %v284 = vld [vmem:[%s225 + $0x48] sm:$0xff]
        %v285 = vld [vmem:[%s225 + $0x50] sm:$0xff]
        %v286 = vld [vmem:[%s225 + $0x58] sm:$0xff]
        %v287 = vld [vmem:[%s225 + $0x60] sm:$0xff]
        %v288 = vld [vmem:[%s225 + $0x68] sm:$0xff]
        %v289 = vld [vmem:[%s225 + $0x70] sm:$0xff]
        %v290 = vld [vmem:[%s225 + $0x78] sm:$0xff]
        %p291 = scmp.eq.s32.totalorder %s28, 0
        // Predicated region
        $region45: #{tpu_custom_call.1} parent=31 // pred_check
          %p292 = pneg %p291
        $region46: #{tpu_custom_call.1} parent=31 // pred_check_branch
          %294 = sbr.rel (%p292) target = $region48
        $region47: #{tpu_custom_call.1} parent=31 // pred_region
          %v295 = vlaneseq
          %v296 = vand.u32 %v295, 127
          %v297 = vadd.s32 %v296, 128
          %v298 = vadd.s32 %v296, 256
          %v299 = vadd.s32 %v296, 384
          %vm300 = vcmp.lt.s32.totalorder %v296, 0
          %v301 = vsub.s32 0, %v296
          %v302 = vsel %vm300, %v301, %v296
          %v303 = vshrl.u32 %v302, 1
          %v304 = vand.u32 %v302, 1
          %v305 = vsub.s32 0, %v304
          %v306 = vsel %vm300, %v305, %v304
          %vm307 = vcmp.lt.s32.totalorder %v297, 0
          %v308 = vsub.s32 0, %v297
          %v309 = vsel %vm307, %v308, %v297
          %v310 = vshrl.u32 %v309, 1
          %v311 = vand.u32 %v309, 1
          %v312 = vsub.s32 0, %v311
          %v313 = vsel %vm307, %v312, %v311
          %vm314 = vcmp.lt.s32.totalorder %v298, 0
          %v315 = vsub.s32 0, %v298
          %v316 = vsel %vm314, %v315, %v298
          %v317 = vshrl.u32 %v316, 1
          %v318 = vand.u32 %v316, 1
          %v319 = vsub.s32 0, %v318
          %v320 = vsel %vm314, %v319, %v318
          %vm321 = vcmp.lt.s32.totalorder %v299, 0
          %v322 = vsub.s32 0, %v299
          %v323 = vsel %vm321, %v322, %v299
          %v324 = vshrl.u32 %v323, 1
          %v325 = vand.u32 %v323, 1
          %v326 = vsub.s32 0, %v325
          %v327 = vsel %vm321, %v326, %v325
          %vm328 = vcmp.ne.s32.totalorder %v306, 0
          %vm329 = vcmp.ne.s32.totalorder %v313, 0
          %vm330 = vcmp.ne.s32.totalorder %v320, 0
          %vm331 = vcmp.ne.s32.totalorder %v327, 0
          %vm332 = vcmp.lt.s32.totalorder %v306, 0
          %vm333 = vcmp.lt.s32.totalorder %v313, 0
          %vm334 = vcmp.lt.s32.totalorder %v320, 0
          %vm335 = vcmp.lt.s32.totalorder %v327, 0
          %vm336 = vmand %vm332, %vm328
          %vm337 = vmand %vm333, %vm329
          %vm338 = vmand %vm334, %vm330
          %vm339 = vmand %vm335, %vm331
          %v340 = vadd.s32 %v306, 2
          %v341 = vadd.s32 %v313, 2
          %v342 = vadd.s32 %v320, 2
          %v343 = vadd.s32 %v327, 2
          %v344 = vsel %vm336, %v340, %v306
          %v345 = vsel %vm337, %v341, %v313
          %v346 = vsel %vm338, %v342, %v320
          %v347 = vsel %vm339, %v343, %v327
          %vm348 = vcmp.eq.s32.totalorder %v344, 0
          %vm349 = vcmp.eq.s32.totalorder %v345, 0
          %vm350 = vcmp.eq.s32.totalorder %v346, 0
          %vm351 = vcmp.eq.s32.totalorder %v347, 0
          %v352 = vsel %vm348, 1.0, -1.0
          %v353 = vsel %vm349, 1.0, -1.0
          %v354 = vsel %vm350, 1.0, -1.0
          %v355 = vsel %vm351, 1.0, -1.0
          %v356 = vunpack.c.l.bf16 %v259
          %v357 = vunpack.c.h.bf16 %v259
          %v358 = vunpack.c.l.bf16 %v260
          %v359 = vunpack.c.h.bf16 %v260
          %v360 = vunpack.c.l.bf16 %v261
          %v361 = vunpack.c.h.bf16 %v261
          %v362 = vunpack.c.l.bf16 %v262
          %v363 = vunpack.c.h.bf16 %v262
          %v364 = vunpack.c.l.bf16 %v263
          %v365 = vunpack.c.h.bf16 %v263
          %v366 = vunpack.c.l.bf16 %v264
          %v367 = vunpack.c.h.bf16 %v264
          %v368 = vunpack.c.l.bf16 %v265
          %v369 = vunpack.c.h.bf16 %v265
          %v370 = vunpack.c.l.bf16 %v266
          %v371 = vunpack.c.h.bf16 %v266
          %v372 = vunpack.c.l.bf16 %v267
          %v373 = vunpack.c.h.bf16 %v267
          %v374 = vunpack.c.l.bf16 %v268
          %v375 = vunpack.c.h.bf16 %v268
          %v376 = vunpack.c.l.bf16 %v269
          %v377 = vunpack.c.h.bf16 %v269
          %v378 = vunpack.c.l.bf16 %v270
          %v379 = vunpack.c.h.bf16 %v270
          %v380 = vunpack.c.l.bf16 %v271
          %v381 = vunpack.c.h.bf16 %v271
          %v382 = vunpack.c.l.bf16 %v272
          %v383 = vunpack.c.h.bf16 %v272
          %v384 = vunpack.c.l.bf16 %v273
          %v385 = vunpack.c.h.bf16 %v273
          %v386 = vunpack.c.l.bf16 %v274
          %v387 = vunpack.c.h.bf16 %v274
          %v388 = vmul.f32 %v356, %v352
          %v389 = vmul.f32 %v357, %v353
          %v390 = vmul.f32 %v358, %v354
          %v391 = vmul.f32 %v359, %v355
          %v392 = vmul.f32 %v360, %v352
          %v393 = vmul.f32 %v361, %v353
          %v394 = vmul.f32 %v362, %v354
          %v395 = vmul.f32 %v363, %v355
          %v396 = vmul.f32 %v364, %v352
          %v397 = vmul.f32 %v365, %v353
          %v398 = vmul.f32 %v366, %v354
          %v399 = vmul.f32 %v367, %v355
          %v400 = vmul.f32 %v368, %v352
          %v401 = vmul.f32 %v369, %v353
          %v402 = vmul.f32 %v370, %v354
          %v403 = vmul.f32 %v371, %v355
          %v404 = vmul.f32 %v372, %v352
          %v405 = vmul.f32 %v373, %v353
          %v406 = vmul.f32 %v374, %v354
          %v407 = vmul.f32 %v375, %v355
          %v408 = vmul.f32 %v376, %v352
          %v409 = vmul.f32 %v377, %v353
          %v410 = vmul.f32 %v378, %v354
          %v411 = vmul.f32 %v379, %v355
          %v412 = vmul.f32 %v380, %v352
          %v413 = vmul.f32 %v381, %v353
          %v414 = vmul.f32 %v382, %v354
          %v415 = vmul.f32 %v383, %v355
          %v416 = vmul.f32 %v384, %v352
          %v417 = vmul.f32 %v385, %v353
          %v418 = vmul.f32 %v386, %v354
          %v419 = vmul.f32 %v387, %v355
          %v420 = vadd.f32 %v388, %v389
          %v421 = vadd.f32 %v420, %v390
          %v422 = vadd.f32 %v421, %v391
          %423 = vadd.xlane.f32.xlu0 %v422
          %v424 = vpop.xlane.xlu0 %423
          %v425 = vadd.f32 %v392, %v393
          %v426 = vadd.f32 %v425, %v394
          %v427 = vadd.f32 %v426, %v395
          %428 = vadd.xlane.f32.xlu0 %v427
          %v429 = vpop.xlane.xlu0 %428
          %v430 = vadd.f32 %v396, %v397
          %v431 = vadd.f32 %v430, %v398
          %v432 = vadd.f32 %v431, %v399
          %433 = vadd.xlane.f32.xlu0 %v432
          %v434 = vpop.xlane.xlu0 %433
          %v435 = vadd.f32 %v400, %v401
          %v436 = vadd.f32 %v435, %v402
          %v437 = vadd.f32 %v436, %v403
          %438 = vadd.xlane.f32.xlu0 %v437
          %v439 = vpop.xlane.xlu0 %438
          %v440 = vadd.f32 %v404, %v405
          %v441 = vadd.f32 %v440, %v406
          %v442 = vadd.f32 %v441, %v407
          %443 = vadd.xlane.f32.xlu0 %v442
          %v444 = vpop.xlane.xlu0 %443
          %v445 = vadd.f32 %v408, %v409
          %v446 = vadd.f32 %v445, %v410
          %v447 = vadd.f32 %v446, %v411
          %448 = vadd.xlane.f32.xlu0 %v447
          %v449 = vpop.xlane.xlu0 %448
          %v450 = vadd.f32 %v412, %v413
          %v451 = vadd.f32 %v450, %v414
          %v452 = vadd.f32 %v451, %v415
          %453 = vadd.xlane.f32.xlu0 %v452
          %v454 = vpop.xlane.xlu0 %453
          %v455 = vadd.f32 %v416, %v417
          %v456 = vadd.f32 %v455, %v418
          %v457 = vadd.f32 %v456, %v419
          %458 = vadd.xlane.f32.xlu0 %v457
          %v459 = vpop.xlane.xlu0 %458
          %v460 = vunpack.c.l.bf16 %v275
          %v461 = vunpack.c.h.bf16 %v275
          %v462 = vunpack.c.l.bf16 %v276
          %v463 = vunpack.c.h.bf16 %v276
          %v464 = vunpack.c.l.bf16 %v277
          %v465 = vunpack.c.h.bf16 %v277
          %v466 = vunpack.c.l.bf16 %v278
          %v467 = vunpack.c.h.bf16 %v278
          %v468 = vunpack.c.l.bf16 %v279
          %v469 = vunpack.c.h.bf16 %v279
          %v470 = vunpack.c.l.bf16 %v280
          %v471 = vunpack.c.h.bf16 %v280
          %v472 = vunpack.c.l.bf16 %v281
          %v473 = vunpack.c.h.bf16 %v281
          %v474 = vunpack.c.l.bf16 %v282
          %v475 = vunpack.c.h.bf16 %v282
          %v476 = vunpack.c.l.bf16 %v283
          %v477 = vunpack.c.h.bf16 %v283
          %v478 = vunpack.c.l.bf16 %v284
          %v479 = vunpack.c.h.bf16 %v284
          %v480 = vunpack.c.l.bf16 %v285
          %v481 = vunpack.c.h.bf16 %v285
          %v482 = vunpack.c.l.bf16 %v286
          %v483 = vunpack.c.h.bf16 %v286
          %v484 = vunpack.c.l.bf16 %v287
          %v485 = vunpack.c.h.bf16 %v287
          %v486 = vunpack.c.l.bf16 %v288
          %v487 = vunpack.c.h.bf16 %v288
          %v488 = vunpack.c.l.bf16 %v289
          %v489 = vunpack.c.h.bf16 %v289
          %v490 = vunpack.c.l.bf16 %v290
          %v491 = vunpack.c.h.bf16 %v290
          %v492 = vmul.f32 %v460, %v352
          %v493 = vmul.f32 %v461, %v353
          %v494 = vmul.f32 %v462, %v354
          %v495 = vmul.f32 %v463, %v355
          %v496 = vmul.f32 %v464, %v352
          %v497 = vmul.f32 %v465, %v353
          %v498 = vmul.f32 %v466, %v354
          %v499 = vmul.f32 %v467, %v355
          %v500 = vmul.f32 %v468, %v352
          %v501 = vmul.f32 %v469, %v353
          %v502 = vmul.f32 %v470, %v354
          %v503 = vmul.f32 %v471, %v355
          %v504 = vmul.f32 %v472, %v352
          %v505 = vmul.f32 %v473, %v353
          %v506 = vmul.f32 %v474, %v354
          %v507 = vmul.f32 %v475, %v355
          %v508 = vmul.f32 %v476, %v352
          %v509 = vmul.f32 %v477, %v353
          %v510 = vmul.f32 %v478, %v354
          %v511 = vmul.f32 %v479, %v355
          %v512 = vmul.f32 %v480, %v352
          %v513 = vmul.f32 %v481, %v353
          %v514 = vmul.f32 %v482, %v354
          %v515 = vmul.f32 %v483, %v355
          %v516 = vmul.f32 %v484, %v352
          %v517 = vmul.f32 %v485, %v353
          %v518 = vmul.f32 %v486, %v354
          %v519 = vmul.f32 %v487, %v355
          %v520 = vmul.f32 %v488, %v352
          %v521 = vmul.f32 %v489, %v353
          %v522 = vmul.f32 %v490, %v354
          %v523 = vmul.f32 %v491, %v355
          %v524 = vadd.f32 %v492, %v493
          %v525 = vadd.f32 %v524, %v494
          %v526 = vadd.f32 %v525, %v495
          %527 = vadd.xlane.f32.xlu0 %v526
          %v528 = vpop.xlane.xlu0 %527
          %v529 = vadd.f32 %v496, %v497
          %v530 = vadd.f32 %v529, %v498
          %v531 = vadd.f32 %v530, %v499
          %532 = vadd.xlane.f32.xlu0 %v531
          %v533 = vpop.xlane.xlu0 %532
          %v534 = vadd.f32 %v500, %v501
          %v535 = vadd.f32 %v534, %v502
          %v536 = vadd.f32 %v535, %v503
          %537 = vadd.xlane.f32.xlu0 %v536
          %v538 = vpop.xlane.xlu0 %537
          %v539 = vadd.f32 %v504, %v505
          %v540 = vadd.f32 %v539, %v506
          %v541 = vadd.f32 %v540, %v507
          %542 = vadd.xlane.f32.xlu0 %v541
          %v543 = vpop.xlane.xlu0 %542
          %v544 = vadd.f32 %v508, %v509
          %v545 = vadd.f32 %v544, %v510
          %v546 = vadd.f32 %v545, %v511
          %547 = vadd.xlane.f32.xlu0 %v546
          %v548 = vpop.xlane.xlu0 %547
          %v549 = vadd.f32 %v512, %v513
          %v550 = vadd.f32 %v549, %v514
          %v551 = vadd.f32 %v550, %v515
          %552 = vadd.xlane.f32.xlu0 %v551
          %v553 = vpop.xlane.xlu0 %552
          %v554 = vadd.f32 %v516, %v517
          %v555 = vadd.f32 %v554, %v518
          %v556 = vadd.f32 %v555, %v519
          %557 = vadd.xlane.f32.xlu0 %v556
          %v558 = vpop.xlane.xlu0 %557
          %v559 = vadd.f32 %v520, %v521
          %v560 = vadd.f32 %v559, %v522
          %v561 = vadd.f32 %v560, %v523
          %562 = vadd.xlane.f32.xlu0 %v561
          %v563 = vpop.xlane.xlu0 %562
          %v564 = vand.u32 2147483647, %v424
          %v565 = vand.u32 2147483647, %v429
          %v566 = vand.u32 2147483647, %v434
          %v567 = vand.u32 2147483647, %v439
          %v568 = vand.u32 2147483647, %v444
          %v569 = vand.u32 2147483647, %v449
          %v570 = vand.u32 2147483647, %v454
          %v571 = vand.u32 2147483647, %v459
          %v572 = vand.u32 2147483647, %v528
          %v573 = vand.u32 2147483647, %v533
          %v574 = vand.u32 2147483647, %v538
          %v575 = vand.u32 2147483647, %v543
          %v576 = vand.u32 2147483647, %v548
          %v577 = vand.u32 2147483647, %v553
          %v578 = vand.u32 2147483647, %v558
          %v579 = vand.u32 2147483647, %v563
          %v580 = vsub.f32 %v564, %v572
          %v581 = vsub.f32 %v565, %v573
          %v582 = vsub.f32 %v566, %v574
          %v583 = vsub.f32 %v567, %v575
          %v584 = vsub.f32 %v568, %v576
          %v585 = vsub.f32 %v569, %v577
          %v586 = vsub.f32 %v570, %v578
          %v587 = vsub.f32 %v571, %v579
          %v588 = vand.u32 2147483647, %v580
          %v589 = vand.u32 2147483647, %v581
          %v590 = vand.u32 2147483647, %v582
          %v591 = vand.u32 2147483647, %v583
          %v592 = vand.u32 2147483647, %v584
          %v593 = vand.u32 2147483647, %v585
          %v594 = vand.u32 2147483647, %v586
          %v595 = vand.u32 2147483647, %v587
          %vm596 = vcmask 7168
          %v597 = vsel %vm596, %v588, 0.0
          %v598 = vsel %vm596, %v589, 0.0
          %v599 = vadd.f32 %v597, %v598
          %v600 = vsel %vm596, %v590, 0.0
          %v601 = vadd.f32 %v599, %v600
          %v602 = vsel %vm596, %v591, 0.0
          %v603 = vadd.f32 %v601, %v602
          %v604 = vsel %vm596, %v592, 0.0
          %v605 = vadd.f32 %v603, %v604
          %v606 = vsel %vm596, %v593, 0.0
          %v607 = vadd.f32 %v605, %v606
          %v608 = vsel %vm596, %v594, 0.0
          %v609 = vadd.f32 %v607, %v608
          %v610 = vsel %vm596, %v595, 0.0
          %v611 = vadd.f32 %v609, %v610
          %612 = vadd.xlane.f32.xlu0 %v611
          %v613 = vpop.xlane.xlu0 %612
          %v614 = vrot.slane %v613, 4
          %v615 = vadd.f32 %v613, %v614
          %v616 = vrot.slane %v615, 2
          %v617 = vadd.f32 %v615, %v616
          %v618 = vrot.slane %v617, 1
          %v619 = vadd.f32 %v617, %v618
          %s620 = vtos %v619
          %v621 = vstv %s620
          %622 = vst [vmem:[%s256] sm:$0xff] %v621
        $region48: #{tpu_custom_call.1} parent=31 // pred_fallthru
          _
        %s623 = smul.u32 %s28, 256
        %s624 = sshra.s32 %s623, 7
        %s625 = sand.u32 %s623, 127
        %s626 = smul.addr %s624, 4
        %s627 = scalar_lea.vmem [#allocation7], %s626
        %v628 = vld [vmem:[%s627] sm:$0xff]
        %v629 = vld [vmem:[%s627 + $0x10] sm:$0xff]
        %v630 = vld [vmem:[%s627 + $0x20] sm:$0xff]
        %v631 = vld [vmem:[%s627 + $0x30] sm:$0xff]
        %v632 = vld [vmem:[%s627 + $0x40] sm:$0xff]
        %v633 = vld [vmem:[%s627 + $0x50] sm:$0xff]
        %v634 = vld [vmem:[%s627 + $0x60] sm:$0xff]
        %v635 = vld [vmem:[%s627 + $0x70] sm:$0xff]
        %v636 = vld [vmem:[%s627 + $0x80] sm:$0xff]
        %v637 = vld [vmem:[%s627 + $0x90] sm:$0xff]
        %v638 = vld [vmem:[%s627 + $0xa0] sm:$0xff]
        %v639 = vld [vmem:[%s627 + $0xb0] sm:$0xff]
        %v640 = vld [vmem:[%s627 + $0xc0] sm:$0xff]
        %v641 = vld [vmem:[%s627 + $0xd0] sm:$0xff]
        %v642 = vld [vmem:[%s627 + $0xe0] sm:$0xff]
        %v643 = vld [vmem:[%s627 + $0xf0] sm:$0xff]
        %v644 = vld [vmem:[%s627 + $0x100] sm:$0xff]
        %v645 = vld [vmem:[%s627 + $0x110] sm:$0xff]
        %v646 = vld [vmem:[%s627 + $0x120] sm:$0xff]
        %v647 = vld [vmem:[%s627 + $0x130] sm:$0xff]
        %v648 = vld [vmem:[%s627 + $0x140] sm:$0xff]
        %v649 = vld [vmem:[%s627 + $0x150] sm:$0xff]
        %v650 = vld [vmem:[%s627 + $0x160] sm:$0xff]
        %v651 = vld [vmem:[%s627 + $0x170] sm:$0xff]
        %v652 = vld [vmem:[%s627 + $0x180] sm:$0xff]
        %v653 = vld [vmem:[%s627 + $0x190] sm:$0xff]
        %v654 = vld [vmem:[%s627 + $0x1a0] sm:$0xff]
        %v655 = vld [vmem:[%s627 + $0x1b0] sm:$0xff]
        %v656 = vld [vmem:[%s627 + $0x1c0] sm:$0xff]
        %v657 = vld [vmem:[%s627 + $0x1d0] sm:$0xff]
        %v658 = vld [vmem:[%s627 + $0x1e0] sm:$0xff]
        %v659 = vld [vmem:[%s627 + $0x1f0] sm:$0xff]
        %v660 = vld [vmem:[%s627 + $0x200] sm:$0xff]
        %v661 = vld [vmem:[%s627 + $0x210] sm:$0xff]
        %v662 = vld [vmem:[%s627 + $0x220] sm:$0xff]
        %v663 = vld [vmem:[%s627 + $0x230] sm:$0xff]
        %v664 = vld [vmem:[%s627 + $0x240] sm:$0xff]
        %v665 = vld [vmem:[%s627 + $0x250] sm:$0xff]
        %v666 = vld [vmem:[%s627 + $0x260] sm:$0xff]
        %v667 = vld [vmem:[%s627 + $0x270] sm:$0xff]
        %v668 = vld [vmem:[%s627 + $0x280] sm:$0xff]
        %v669 = vld [vmem:[%s627 + $0x290] sm:$0xff]
        %v670 = vld [vmem:[%s627 + $0x2a0] sm:$0xff]
        %v671 = vld [vmem:[%s627 + $0x2b0] sm:$0xff]
        %v672 = vld [vmem:[%s627 + $0x2c0] sm:$0xff]
        %v673 = vld [vmem:[%s627 + $0x2d0] sm:$0xff]
        %v674 = vld [vmem:[%s627 + $0x2e0] sm:$0xff]
        %v675 = vld [vmem:[%s627 + $0x2f0] sm:$0xff]
        %v676 = vld [vmem:[%s627 + $0x300] sm:$0xff]
        %v677 = vld [vmem:[%s627 + $0x310] sm:$0xff]
        %v678 = vld [vmem:[%s627 + $0x320] sm:$0xff]
        %v679 = vld [vmem:[%s627 + $0x330] sm:$0xff]
        %v680 = vld [vmem:[%s627 + $0x340] sm:$0xff]
        %v681 = vld [vmem:[%s627 + $0x350] sm:$0xff]
        %v682 = vld [vmem:[%s627 + $0x360] sm:$0xff]
        %v683 = vld [vmem:[%s627 + $0x370] sm:$0xff]
        %v684 = vld [vmem:[%s627 + $0x380] sm:$0xff]
        %v685 = vld [vmem:[%s627 + $0x390] sm:$0xff]
        %v686 = vld [vmem:[%s627 + $0x3a0] sm:$0xff]
        %v687 = vld [vmem:[%s627 + $0x3b0] sm:$0xff]
        %v688 = vld [vmem:[%s627 + $0x3c0] sm:$0xff]
        %v689 = vld [vmem:[%s627 + $0x3d0] sm:$0xff]
        %v690 = vld [vmem:[%s627 + $0x3e0] sm:$0xff]
        %v691 = vld [vmem:[%s627 + $0x3f0] sm:$0xff]
        %v708 = vunpack.c.l.b16 %v259
        %v709 = vunpack.c.h.b16 %v259
        %v710 = vunpack.c.l.b16 %v260
        %v711 = vunpack.c.h.b16 %v260
        %v712 = vunpack.c.l.b16 %v261
        %v713 = vunpack.c.h.b16 %v261
        %v714 = vunpack.c.l.b16 %v262
        %v715 = vunpack.c.h.b16 %v262
        %v716 = vunpack.c.l.b16 %v263
        %v717 = vunpack.c.h.b16 %v263
        %v718 = vunpack.c.l.b16 %v264
        %v719 = vunpack.c.h.b16 %v264
        %v720 = vunpack.c.l.b16 %v265
        %v721 = vunpack.c.h.b16 %v265
        %v722 = vunpack.c.l.b16 %v266
        %v723 = vunpack.c.h.b16 %v266
        %v724 = vunpack.c.l.b16 %v267
        %v725 = vunpack.c.h.b16 %v267
        %v726 = vunpack.c.l.b16 %v268
        %v727 = vunpack.c.h.b16 %v268
        %v728 = vunpack.c.l.b16 %v269
        %v729 = vunpack.c.h.b16 %v269
        %v730 = vunpack.c.l.b16 %v270
        %v731 = vunpack.c.h.b16 %v270
        %v732 = vunpack.c.l.b16 %v271
        %v733 = vunpack.c.h.b16 %v271
        %v734 = vunpack.c.l.b16 %v272
        %v735 = vunpack.c.h.b16 %v272
        %v736 = vunpack.c.l.b16 %v273
        %v737 = vunpack.c.h.b16 %v273
        %v738 = vunpack.c.l.b16 %v274
        %v739 = vunpack.c.h.b16 %v274
        %v740 = vpack.c.b16 %v712, %v708
        %v741 = vpack.c.b16 %v713, %v709
        %v742 = vpack.c.b16 %v714, %v710
        %v743 = vpack.c.b16 %v715, %v711
        %v744 = vpack.c.b16 %v720, %v716
        %v745 = vpack.c.b16 %v721, %v717
        %v746 = vpack.c.b16 %v722, %v718
        %v747 = vpack.c.b16 %v723, %v719
        %v748 = vpack.c.b16 %v728, %v724
        %v749 = vpack.c.b16 %v729, %v725
        %v750 = vpack.c.b16 %v730, %v726
        %v751 = vpack.c.b16 %v731, %v727
        %v752 = vpack.c.b16 %v736, %v732
        %v753 = vpack.c.b16 %v737, %v733
        %v754 = vpack.c.b16 %v738, %v734
        %v755 = vpack.c.b16 %v739, %v735
        %v836 = vunpack.c.l.b16 %v628
        %v837 = vunpack.c.h.b16 %v628
        %v838 = vunpack.c.l.b16 %v629
        %v839 = vunpack.c.h.b16 %v629
        %v840 = vunpack.c.l.b16 %v630
        %v841 = vunpack.c.h.b16 %v630
        %v842 = vunpack.c.l.b16 %v631
        %v843 = vunpack.c.h.b16 %v631
        %v844 = vunpack.c.l.b16 %v632
        %v845 = vunpack.c.h.b16 %v632
        %v846 = vunpack.c.l.b16 %v633
        %v847 = vunpack.c.h.b16 %v633
        %v848 = vunpack.c.l.b16 %v634
        %v849 = vunpack.c.h.b16 %v634
        %v850 = vunpack.c.l.b16 %v635
        %v851 = vunpack.c.h.b16 %v635
        %v852 = vunpack.c.l.b16 %v636
        %v853 = vunpack.c.h.b16 %v636
        %v854 = vunpack.c.l.b16 %v637
        %v855 = vunpack.c.h.b16 %v637
        %v856 = vunpack.c.l.b16 %v638
        %v857 = vunpack.c.h.b16 %v638
        %v858 = vunpack.c.l.b16 %v639
        %v859 = vunpack.c.h.b16 %v639
        %v860 = vunpack.c.l.b16 %v640
        %v861 = vunpack.c.h.b16 %v640
        %v862 = vunpack.c.l.b16 %v641
        %v863 = vunpack.c.h.b16 %v641
        %v864 = vunpack.c.l.b16 %v642
        %v865 = vunpack.c.h.b16 %v642
        %v866 = vunpack.c.l.b16 %v643
        %v867 = vunpack.c.h.b16 %v643
        %v868 = vunpack.c.l.b16 %v644
        %v869 = vunpack.c.h.b16 %v644
        %v870 = vunpack.c.l.b16 %v645
        %v871 = vunpack.c.h.b16 %v645
        %v872 = vunpack.c.l.b16 %v646
        %v873 = vunpack.c.h.b16 %v646
        %v874 = vunpack.c.l.b16 %v647
        %v875 = vunpack.c.h.b16 %v647
        %v876 = vunpack.c.l.b16 %v648
        %v877 = vunpack.c.h.b16 %v648
        %v878 = vunpack.c.l.b16 %v649
        %v879 = vunpack.c.h.b16 %v649
        %v880 = vunpack.c.l.b16 %v650
        %v881 = vunpack.c.h.b16 %v650
        %v882 = vunpack.c.l.b16 %v651
        %v883 = vunpack.c.h.b16 %v651
        %v884 = vunpack.c.l.b16 %v652
        %v885 = vunpack.c.h.b16 %v652
        %v886 = vunpack.c.l.b16 %v653
        %v887 = vunpack.c.h.b16 %v653
        %v888 = vunpack.c.l.b16 %v654
        %v889 = vunpack.c.h.b16 %v654
        %v890 = vunpack.c.l.b16 %v655
        %v891 = vunpack.c.h.b16 %v655
        %v892 = vunpack.c.l.b16 %v656
        %v893 = vunpack.c.h.b16 %v656
        %v894 = vunpack.c.l.b16 %v657
        %v895 = vunpack.c.h.b16 %v657
        %v896 = vunpack.c.l.b16 %v658
        %v897 = vunpack.c.h.b16 %v658
        %v898 = vunpack.c.l.b16 %v659
        %v899 = vunpack.c.h.b16 %v659
        %v900 = vunpack.c.l.b16 %v660
        %v901 = vunpack.c.h.b16 %v660
        %v902 = vunpack.c.l.b16 %v661
        %v903 = vunpack.c.h.b16 %v661
        %v904 = vunpack.c.l.b16 %v662
        %v905 = vunpack.c.h.b16 %v662
        %v906 = vunpack.c.l.b16 %v663
        %v907 = vunpack.c.h.b16 %v663
        %v908 = vunpack.c.l.b16 %v664
        %v909 = vunpack.c.h.b16 %v664
        %v910 = vunpack.c.l.b16 %v665
        %v911 = vunpack.c.h.b16 %v665
        %v912 = vunpack.c.l.b16 %v666
        %v913 = vunpack.c.h.b16 %v666
        %v914 = vunpack.c.l.b16 %v667
        %v915 = vunpack.c.h.b16 %v667
        %v916 = vunpack.c.l.b16 %v668
        %v917 = vunpack.c.h.b16 %v668
        %v918 = vunpack.c.l.b16 %v669
        %v919 = vunpack.c.h.b16 %v669
        %v920 = vunpack.c.l.b16 %v670
        %v921 = vunpack.c.h.b16 %v670
        %v922 = vunpack.c.l.b16 %v671
        %v923 = vunpack.c.h.b16 %v671
        %v924 = vunpack.c.l.b16 %v672
        %v925 = vunpack.c.h.b16 %v672
        %v926 = vunpack.c.l.b16 %v673
        %v927 = vunpack.c.h.b16 %v673
        %v928 = vunpack.c.l.b16 %v674
        %v929 = vunpack.c.h.b16 %v674
        %v930 = vunpack.c.l.b16 %v675
        %v931 = vunpack.c.h.b16 %v675
        %v932 = vunpack.c.l.b16 %v676
        %v933 = vunpack.c.h.b16 %v676
        %v934 = vunpack.c.l.b16 %v677
        %v935 = vunpack.c.h.b16 %v677
        %v936 = vunpack.c.l.b16 %v678
        %v937 = vunpack.c.h.b16 %v678
        %v938 = vunpack.c.l.b16 %v679
        %v939 = vunpack.c.h.b16 %v679
        %v940 = vunpack.c.l.b16 %v680
        %v941 = vunpack.c.h.b16 %v680
        %v942 = vunpack.c.l.b16 %v681
        %v943 = vunpack.c.h.b16 %v681
        %v944 = vunpack.c.l.b16 %v682
        %v945 = vunpack.c.h.b16 %v682
        %v946 = vunpack.c.l.b16 %v683
        %v947 = vunpack.c.h.b16 %v683
        %v948 = vunpack.c.l.b16 %v684
        %v949 = vunpack.c.h.b16 %v684
        %v950 = vunpack.c.l.b16 %v685
        %v951 = vunpack.c.h.b16 %v685
        %v952 = vunpack.c.l.b16 %v686
        %v953 = vunpack.c.h.b16 %v686
        %v954 = vunpack.c.l.b16 %v687
        %v955 = vunpack.c.h.b16 %v687
        %v956 = vunpack.c.l.b16 %v688
        %v957 = vunpack.c.h.b16 %v688
        %v958 = vunpack.c.l.b16 %v689
        %v959 = vunpack.c.h.b16 %v689
        %v960 = vunpack.c.l.b16 %v690
        %v961 = vunpack.c.h.b16 %v690
        %v962 = vunpack.c.l.b16 %v691
        %v963 = vunpack.c.h.b16 %v691
        %v964 = vpack.c.b16 %v838, %v836
        %v965 = vpack.c.b16 %v839, %v837
        %v966 = vpack.c.b16 %v842, %v840
        %v967 = vpack.c.b16 %v843, %v841
        %v968 = vpack.c.b16 %v846, %v844
        %v969 = vpack.c.b16 %v847, %v845
        %v970 = vpack.c.b16 %v850, %v848
        %v971 = vpack.c.b16 %v851, %v849
        %v972 = vpack.c.b16 %v854, %v852
        %v973 = vpack.c.b16 %v855, %v853
        %v974 = vpack.c.b16 %v858, %v856
        %v975 = vpack.c.b16 %v859, %v857
        %v976 = vpack.c.b16 %v862, %v860
        %v977 = vpack.c.b16 %v863, %v861
        %v978 = vpack.c.b16 %v866, %v864
        %v979 = vpack.c.b16 %v867, %v865
        %v980 = vpack.c.b16 %v870, %v868
        %v981 = vpack.c.b16 %v871, %v869
        %v982 = vpack.c.b16 %v874, %v872
        %v983 = vpack.c.b16 %v875, %v873
        %v984 = vpack.c.b16 %v878, %v876
        %v985 = vpack.c.b16 %v879, %v877
        %v986 = vpack.c.b16 %v882, %v880
        %v987 = vpack.c.b16 %v883, %v881
        %v988 = vpack.c.b16 %v886, %v884
        %v989 = vpack.c.b16 %v887, %v885
        %v990 = vpack.c.b16 %v890, %v888
        %v991 = vpack.c.b16 %v891, %v889
        %v992 = vpack.c.b16 %v894, %v892
        %v993 = vpack.c.b16 %v895, %v893
        %v994 = vpack.c.b16 %v898, %v896
        %v995 = vpack.c.b16 %v899, %v897
        %v996 = vpack.c.b16 %v902, %v900
        %v997 = vpack.c.b16 %v903, %v901
        %v998 = vpack.c.b16 %v906, %v904
        %v999 = vpack.c.b16 %v907, %v905
        %v1000 = vpack.c.b16 %v910, %v908
        %v1001 = vpack.c.b16 %v911, %v909
        %v1002 = vpack.c.b16 %v914, %v912
        %v1003 = vpack.c.b16 %v915, %v913
        %v1004 = vpack.c.b16 %v918, %v916
        %v1005 = vpack.c.b16 %v919, %v917
        %v1006 = vpack.c.b16 %v922, %v920
        %v1007 = vpack.c.b16 %v923, %v921
        %v1008 = vpack.c.b16 %v926, %v924
        %v1009 = vpack.c.b16 %v927, %v925
        %v1010 = vpack.c.b16 %v930, %v928
        %v1011 = vpack.c.b16 %v931, %v929
        %v1012 = vpack.c.b16 %v934, %v932
        %v1013 = vpack.c.b16 %v935, %v933
        %v1014 = vpack.c.b16 %v938, %v936
        %v1015 = vpack.c.b16 %v939, %v937
        %v1016 = vpack.c.b16 %v942, %v940
        %v1017 = vpack.c.b16 %v943, %v941
        %v1018 = vpack.c.b16 %v946, %v944
        %v1019 = vpack.c.b16 %v947, %v945
        %v1020 = vpack.c.b16 %v950, %v948
        %v1021 = vpack.c.b16 %v951, %v949
        %v1022 = vpack.c.b16 %v954, %v952
        %v1023 = vpack.c.b16 %v955, %v953
        %v1024 = vpack.c.b16 %v958, %v956
        %v1025 = vpack.c.b16 %v959, %v957
        %v1026 = vpack.c.b16 %v962, %v960
        %v1027 = vpack.c.b16 %v963, %v961
        %1092 = vmatprep.subr.bf16.mxu0 %v965
        %1093 = vmatpush1.bf16.msra.mxu0 %v964
        %1094 = vmatprep.subr.bf16.mxu0 %v967
        %1095 = vmatpush1.bf16.msra.mxu0 %v966
        %1096 = vmatprep.subr.bf16.mxu0 %v969
        %1097 = vmatpush1.bf16.msra.mxu0 %v968
        %1098 = vmatprep.subr.bf16.mxu0 %v971
        %1099 = vmatpush1.bf16.msra.mxu0 %v970
        %1100 = vmatprep.subr.bf16.mxu0 %v973
        %1101 = vmatpush1.bf16.msra.mxu0 %v972
        %1102 = vmatprep.subr.bf16.mxu0 %v975
        %1103 = vmatpush1.bf16.msra.mxu0 %v974
        %1104 = vmatprep.subr.bf16.mxu0 %v977
        %1105 = vmatpush1.bf16.msra.mxu0 %v976
        %1106 = vmatprep.subr.bf16.mxu0 %v979
        %1107 = vmatpush1.bf16.msra.mxu0 %v978
        %1108 = vmatprep.subr.bf16.mxu0 %v981
        %1109 = vmatpush1.bf16.msra.mxu0 %v980
        %1110 = vmatprep.subr.bf16.mxu0 %v983
        %1111 = vmatpush1.bf16.msra.mxu0 %v982
        %1112 = vmatprep.subr.bf16.mxu0 %v985
        %1113 = vmatpush1.bf16.msra.mxu0 %v984
        %1114 = vmatprep.subr.bf16.mxu0 %v987
        %1115 = vmatpush1.bf16.msra.mxu0 %v986
        %1116 = vmatprep.subr.bf16.mxu0 %v989
        %1117 = vmatpush1.bf16.msra.mxu0 %v988
        %1118 = vmatprep.subr.bf16.mxu0 %v991
        %1119 = vmatpush1.bf16.msra.mxu0 %v990
        %1120 = vmatprep.subr.bf16.mxu0 %v993
        %1121 = vmatpush1.bf16.msra.mxu0 %v992
        %1122 = vmatprep.subr.bf16.mxu0 %v995
        %1123 = vmatpush1.bf16.msra.mxu0 %v994
        %1124 = vmatprep.mubr.bf16.mxu0 %v741
        %1125 = vmatmul.mubr.bf16.gmra.mrb[0].mxu0 %v740
        %v1126 = vpop.f32.mrb[0].mxu0
        %v1127 = vadd.f32 0.0, %v1126
        %v1128 = vpop.f32.mrb[0].mxu0
        %v1129 = vadd.f32 0.0, %v1128
        %v1130 = vpop.f32.mrb[0].mxu0
        %v1131 = vadd.f32 0.0, %v1130
        %v1132 = vpop.f32.mrb[0].mxu0
        %v1133 = vadd.f32 0.0, %v1132
        %1134 = vmatprep.mubr.bf16.mxu0 %v745
        %1135 = vmatmul.mubr.bf16.gmra.mrb[0].mxu0 %v744
        %v1136 = vpop.f32.mrb[0].mxu0
        %v1137 = vadd.f32 0.0, %v1136
        %v1138 = vpop.f32.mrb[0].mxu0
        %v1139 = vadd.f32 0.0, %v1138
        %v1140 = vpop.f32.mrb[0].mxu0
        %v1141 = vadd.f32 0.0, %v1140
        %v1142 = vpop.f32.mrb[0].mxu0
        %v1143 = vadd.f32 0.0, %v1142
        %1144 = vmatprep.mubr.bf16.mxu0 %v749
        %1145 = vmatmul.mubr.bf16.gmra.mrb[0].mxu0 %v748
        %v1146 = vpop.f32.mrb[0].mxu0
        %v1147 = vadd.f32 0.0, %v1146
        %v1148 = vpop.f32.mrb[0].mxu0
        %v1149 = vadd.f32 0.0, %v1148
        %v1150 = vpop.f32.mrb[0].mxu0
        %v1151 = vadd.f32 0.0, %v1150
        %v1152 = vpop.f32.mrb[0].mxu0
        %v1153 = vadd.f32 0.0, %v1152
        %1154 = vmatprep.mubr.bf16.mxu0 %v753
        %1155 = vmatmul.mubr.bf16.gmra.mrb[0].mxu0 %v752
        %v1156 = vpop.f32.mrb[0].mxu0
        %v1157 = vadd.f32 0.0, %v1156
        %v1158 = vpop.f32.mrb[0].mxu0
        %v1159 = vadd.f32 0.0, %v1158
        %v1160 = vpop.f32.mrb[0].mxu0
        %v1161 = vadd.f32 0.0, %v1160
        %v1162 = vpop.f32.mrb[0].mxu0
        %v1163 = vadd.f32 0.0, %v1162
        %1164 = vdwg.mxu0
        %1165 = vmatprep.subr.bf16.mxu0 %v997
        %1166 = vmatpush1.bf16.msra.mxu0 %v996
        %1167 = vmatprep.subr.bf16.mxu0 %v999
        %1168 = vmatpush1.bf16.msra.mxu0 %v998
        %1169 = vmatprep.subr.bf16.mxu0 %v1001
        %1170 = vmatpush1.bf16.msra.mxu0 %v1000
        %1171 = vmatprep.subr.bf16.mxu0 %v1003
        %1172 = vmatpush1.bf16.msra.mxu0 %v1002
        %1173 = vmatprep.subr.bf16.mxu0 %v1005
        %1174 = vmatpush1.bf16.msra.mxu0 %v1004
        %1175 = vmatprep.subr.bf16.mxu0 %v1007
        %1176 = vmatpush1.bf16.msra.mxu0 %v1006
        %1177 = vmatprep.subr.bf16.mxu0 %v1009
        %1178 = vmatpush1.bf16.msra.mxu0 %v1008
        %1179 = vmatprep.subr.bf16.mxu0 %v1011
        %1180 = vmatpush1.bf16.msra.mxu0 %v1010
        %1181 = vmatprep.subr.bf16.mxu0 %v1013
        %1182 = vmatpush1.bf16.msra.mxu0 %v1012
        %1183 = vmatprep.subr.bf16.mxu0 %v1015
        %1184 = vmatpush1.bf16.msra.mxu0 %v1014
        %1185 = vmatprep.subr.bf16.mxu0 %v1017
        %1186 = vmatpush1.bf16.msra.mxu0 %v1016
        %1187 = vmatprep.subr.bf16.mxu0 %v1019
        %1188 = vmatpush1.bf16.msra.mxu0 %v1018
        %1189 = vmatprep.subr.bf16.mxu0 %v1021
        %1190 = vmatpush1.bf16.msra.mxu0 %v1020
        %1191 = vmatprep.subr.bf16.mxu0 %v1023
        %1192 = vmatpush1.bf16.msra.mxu0 %v1022
        %1193 = vmatprep.subr.bf16.mxu0 %v1025
        %1194 = vmatpush1.bf16.msra.mxu0 %v1024
        %1195 = vmatprep.subr.bf16.mxu0 %v1027
        %1196 = vmatpush1.bf16.msra.mxu0 %v1026
        %1197 = vmatprep.mubr.bf16.mxu0 %v743
        %1198 = vmatmul.mubr.bf16.gmra.mrb[0].mxu0 %v742
        %v1199 = vpop.f32.mrb[0].mxu0
        %v1200 = vadd.f32 %v1127, %v1199
        %v1201 = vpop.f32.mrb[0].mxu0
        %v1202 = vadd.f32 %v1129, %v1201
        %v1203 = vpop.f32.mrb[0].mxu0
        %v1204 = vadd.f32 %v1131, %v1203
        %v1205 = vpop.f32.mrb[0].mxu0
        %v1206 = vadd.f32 %v1133, %v1205
        %1207 = vmatprep.mubr.bf16.mxu0 %v747
        %1208 = vmatmul.mubr.bf16.gmra.mrb[0].mxu0 %v746
        %v1209 = vpop.f32.mrb[0].mxu0
        %v1210 = vadd.f32 %v1137, %v1209
        %v1211 = vpop.f32.mrb[0].mxu0
        %v1212 = vadd.f32 %v1139, %v1211
        %v1213 = vpop.f32.mrb[0].mxu0
        %v1214 = vadd.f32 %v1141, %v1213
        %v1215 = vpop.f32.mrb[0].mxu0
        %v1216 = vadd.f32 %v1143, %v1215
        %1217 = vmatprep.mubr.bf16.mxu0 %v751
        %1218 = vmatmul.mubr.bf16.gmra.mrb[0].mxu0 %v750
        %v1219 = vpop.f32.mrb[0].mxu0
        %v1220 = vadd.f32 %v1147, %v1219
        %v1221 = vpop.f32.mrb[0].mxu0
        %v1222 = vadd.f32 %v1149, %v1221
        %v1223 = vpop.f32.mrb[0].mxu0
        %v1224 = vadd.f32 %v1151, %v1223
        %v1225 = vpop.f32.mrb[0].mxu0
        %v1226 = vadd.f32 %v1153, %v1225
        %1227 = vmatprep.mubr.bf16.mxu0 %v755
        %1228 = vmatmul.mubr.bf16.gmra.mrb[0].mxu0 %v754
        %v1229 = vpop.f32.mrb[0].mxu0
        %v1230 = vadd.f32 %v1157, %v1229
        %v1231 = vpop.f32.mrb[0].mxu0
        %v1232 = vadd.f32 %v1159, %v1231
        %v1233 = vpop.f32.mrb[0].mxu0
        %v1234 = vadd.f32 %v1161, %v1233
        %v1235 = vpop.f32.mrb[0].mxu0
        %v1236 = vadd.f32 %v1163, %v1235
        %1237 = vdwg.mxu0
        %v1254 = vunpack.c.l.b16 %v275
        %v1255 = vunpack.c.h.b16 %v275
        %v1256 = vunpack.c.l.b16 %v276
        %v1257 = vunpack.c.h.b16 %v276
        %v1258 = vunpack.c.l.b16 %v277
        %v1259 = vunpack.c.h.b16 %v277
        %v1260 = vunpack.c.l.b16 %v278
        %v1261 = vunpack.c.h.b16 %v278
        %v1262 = vunpack.c.l.b16 %v279
        %v1263 = vunpack.c.h.b16 %v279
        %v1264 = vunpack.c.l.b16 %v280
        %v1265 = vunpack.c.h.b16 %v280
        %v1266 = vunpack.c.l.b16 %v281
        %v1267 = vunpack.c.h.b16 %v281
        %v1268 = vunpack.c.l.b16 %v282
        %v1269 = vunpack.c.h.b16 %v282
        %v1270 = vunpack.c.l.b16 %v283
        %v1271 = vunpack.c.h.b16 %v283
        %v1272 = vunpack.c.l.b16 %v284
        %v1273 = vunpack.c.h.b16 %v284
        %v1274 = vunpack.c.l.b16 %v285
        %v1275 = vunpack.c.h.b16 %v285
        %v1276 = vunpack.c.l.b16 %v286
        %v1277 = vunpack.c.h.b16 %v286
        %v1278 = vunpack.c.l.b16 %v287
        %v1279 = vunpack.c.h.b16 %v287
        %v1280 = vunpack.c.l.b16 %v288
        %v1281 = vunpack.c.h.b16 %v288
        %v1282 = vunpack.c.l.b16 %v289
        %v1283 = vunpack.c.h.b16 %v289
        %v1284 = vunpack.c.l.b16 %v290
        %v1285 = vunpack.c.h.b16 %v290
        %v1286 = vpack.c.b16 %v1258, %v1254
        %v1287 = vpack.c.b16 %v1259, %v1255
        %v1288 = vpack.c.b16 %v1260, %v1256
        %v1289 = vpack.c.b16 %v1261, %v1257
        %v1290 = vpack.c.b16 %v1266, %v1262
        %v1291 = vpack.c.b16 %v1267, %v1263
        %v1292 = vpack.c.b16 %v1268, %v1264
        %v1293 = vpack.c.b16 %v1269, %v1265
        %v1294 = vpack.c.b16 %v1274, %v1270
        %v1295 = vpack.c.b16 %v1275, %v1271
        %v1296 = vpack.c.b16 %v1276, %v1272
        %v1297 = vpack.c.b16 %v1277, %v1273
        %v1298 = vpack.c.b16 %v1282, %v1278
        %v1299 = vpack.c.b16 %v1283, %v1279
        %v1300 = vpack.c.b16 %v1284, %v1280
        %v1301 = vpack.c.b16 %v1285, %v1281
        %1318 = vmatprep.subr.bf16.mxu0 %v965
        %1319 = vmatpush1.bf16.msra.mxu0 %v964
        %1320 = vmatprep.subr.bf16.mxu0 %v967
        %1321 = vmatpush1.bf16.msra.mxu0 %v966
        %1322 = vmatprep.subr.bf16.mxu0 %v969
        %1323 = vmatpush1.bf16.msra.mxu0 %v968
        %1324 = vmatprep.subr.bf16.mxu0 %v971
        %1325 = vmatpush1.bf16.msra.mxu0 %v970
        %1326 = vmatprep.subr.bf16.mxu0 %v973
        %1327 = vmatpush1.bf16.msra.mxu0 %v972
        %1328 = vmatprep.subr.bf16.mxu0 %v975
        %1329 = vmatpush1.bf16.msra.mxu0 %v974
        %1330 = vmatprep.subr.bf16.mxu0 %v977
        %1331 = vmatpush1.bf16.msra.mxu0 %v976
        %1332 = vmatprep.subr.bf16.mxu0 %v979
        %1333 = vmatpush1.bf16.msra.mxu0 %v978
        %1334 = vmatprep.subr.bf16.mxu0 %v981
        %1335 = vmatpush1.bf16.msra.mxu0 %v980
        %1336 = vmatprep.subr.bf16.mxu0 %v983
        %1337 = vmatpush1.bf16.msra.mxu0 %v982
        %1338 = vmatprep.subr.bf16.mxu0 %v985
        %1339 = vmatpush1.bf16.msra.mxu0 %v984
        %1340 = vmatprep.subr.bf16.mxu0 %v987
        %1341 = vmatpush1.bf16.msra.mxu0 %v986
        %1342 = vmatprep.subr.bf16.mxu0 %v989
        %1343 = vmatpush1.bf16.msra.mxu0 %v988
        %1344 = vmatprep.subr.bf16.mxu0 %v991
        %1345 = vmatpush1.bf16.msra.mxu0 %v990
        %1346 = vmatprep.subr.bf16.mxu0 %v993
        %1347 = vmatpush1.bf16.msra.mxu0 %v992
        %1348 = vmatprep.subr.bf16.mxu0 %v995
        %1349 = vmatpush1.bf16.msra.mxu0 %v994
        %1350 = vmatprep.mubr.bf16.mxu0 %v1287
        %1351 = vmatmul.mubr.bf16.gmra.mrb[0].mxu0 %v1286
        %v1352 = vpop.f32.mrb[0].mxu0
        %v1353 = vadd.f32 0.0, %v1352
        %v1354 = vpop.f32.mrb[0].mxu0
        %v1355 = vadd.f32 0.0, %v1354
        %v1356 = vpop.f32.mrb[0].mxu0
        %v1357 = vadd.f32 0.0, %v1356
        %v1358 = vpop.f32.mrb[0].mxu0
        %v1359 = vadd.f32 0.0, %v1358
        %1360 = vmatprep.mubr.bf16.mxu0 %v1291
        %1361 = vmatmul.mubr.bf16.gmra.mrb[0].mxu0 %v1290
        %v1362 = vpop.f32.mrb[0].mxu0
        %v1363 = vadd.f32 0.0, %v1362
        %v1364 = vpop.f32.mrb[0].mxu0
        %v1365 = vadd.f32 0.0, %v1364
        %v1366 = vpop.f32.mrb[0].mxu0
        %v1367 = vadd.f32 0.0, %v1366
        %v1368 = vpop.f32.mrb[0].mxu0
        %v1369 = vadd.f32 0.0, %v1368
        %1370 = vmatprep.mubr.bf16.mxu0 %v1295
        %1371 = vmatmul.mubr.bf16.gmra.mrb[0].mxu0 %v1294
        %v1372 = vpop.f32.mrb[0].mxu0
        %v1373 = vadd.f32 0.0, %v1372
        %v1374 = vpop.f32.mrb[0].mxu0
        %v1375 = vadd.f32 0.0, %v1374
        %v1376 = vpop.f32.mrb[0].mxu0
        %v1377 = vadd.f32 0.0, %v1376
        %v1378 = vpop.f32.mrb[0].mxu0
        %v1379 = vadd.f32 0.0, %v1378
        %1380 = vmatprep.mubr.bf16.mxu0 %v1299
        %1381 = vmatmul.mubr.bf16.gmra.mrb[0].mxu0 %v1298
        %v1382 = vpop.f32.mrb[0].mxu0
        %v1383 = vadd.f32 0.0, %v1382
        %v1384 = vpop.f32.mrb[0].mxu0
        %v1385 = vadd.f32 0.0, %v1384
        %v1386 = vpop.f32.mrb[0].mxu0
        %v1387 = vadd.f32 0.0, %v1386
        %v1388 = vpop.f32.mrb[0].mxu0
        %v1389 = vadd.f32 0.0, %v1388
        %1390 = vdwg.mxu0
        %1391 = vmatprep.subr.bf16.mxu0 %v997
        %1392 = vmatpush1.bf16.msra.mxu0 %v996
        %1393 = vmatprep.subr.bf16.mxu0 %v999
        %1394 = vmatpush1.bf16.msra.mxu0 %v998
        %1395 = vmatprep.subr.bf16.mxu0 %v1001
        %1396 = vmatpush1.bf16.msra.mxu0 %v1000
        %1397 = vmatprep.subr.bf16.mxu0 %v1003
        %1398 = vmatpush1.bf16.msra.mxu0 %v1002
        %1399 = vmatprep.subr.bf16.mxu0 %v1005
        %1400 = vmatpush1.bf16.msra.mxu0 %v1004
        %1401 = vmatprep.subr.bf16.mxu0 %v1007
        %1402 = vmatpush1.bf16.msra.mxu0 %v1006
        %1403 = vmatprep.subr.bf16.mxu0 %v1009
        %1404 = vmatpush1.bf16.msra.mxu0 %v1008
        %1405 = vmatprep.subr.bf16.mxu0 %v1011
        %1406 = vmatpush1.bf16.msra.mxu0 %v1010
        %1407 = vmatprep.subr.bf16.mxu0 %v1013
        %1408 = vmatpush1.bf16.msra.mxu0 %v1012
        %1409 = vmatprep.subr.bf16.mxu0 %v1015
        %1410 = vmatpush1.bf16.msra.mxu0 %v1014
        %1411 = vmatprep.subr.bf16.mxu0 %v1017
        %1412 = vmatpush1.bf16.msra.mxu0 %v1016
        %1413 = vmatprep.subr.bf16.mxu0 %v1019
        %1414 = vmatpush1.bf16.msra.mxu0 %v1018
        %1415 = vmatprep.subr.bf16.mxu0 %v1021
        %1416 = vmatpush1.bf16.msra.mxu0 %v1020
        %1417 = vmatprep.subr.bf16.mxu0 %v1023
        %1418 = vmatpush1.bf16.msra.mxu0 %v1022
        %1419 = vmatprep.subr.bf16.mxu0 %v1025
        %1420 = vmatpush1.bf16.msra.mxu0 %v1024
        %1421 = vmatprep.subr.bf16.mxu0 %v1027
        %1422 = vmatpush1.bf16.msra.mxu0 %v1026
        %1423 = vmatprep.mubr.bf16.mxu0 %v1289
        %1424 = vmatmul.mubr.bf16.gmra.mrb[0].mxu0 %v1288
        %v1425 = vpop.f32.mrb[0].mxu0
        %v1426 = vadd.f32 %v1353, %v1425
        %v1427 = vpop.f32.mrb[0].mxu0
        %v1428 = vadd.f32 %v1355, %v1427
        %v1429 = vpop.f32.mrb[0].mxu0
        %v1430 = vadd.f32 %v1357, %v1429
        %v1431 = vpop.f32.mrb[0].mxu0
        %v1432 = vadd.f32 %v1359, %v1431
        %1433 = vmatprep.mubr.bf16.mxu0 %v1293
        %1434 = vmatmul.mubr.bf16.gmra.mrb[0].mxu0 %v1292
        %v1435 = vpop.f32.mrb[0].mxu0
        %v1436 = vadd.f32 %v1363, %v1435
        %v1437 = vpop.f32.mrb[0].mxu0
        %v1438 = vadd.f32 %v1365, %v1437
        %v1439 = vpop.f32.mrb[0].mxu0
        %v1440 = vadd.f32 %v1367, %v1439
        %v1441 = vpop.f32.mrb[0].mxu0
        %v1442 = vadd.f32 %v1369, %v1441
        %1443 = vmatprep.mubr.bf16.mxu0 %v1297
        %1444 = vmatmul.mubr.bf16.gmra.mrb[0].mxu0 %v1296
        %v1445 = vpop.f32.mrb[0].mxu0
        %v1446 = vadd.f32 %v1373, %v1445
        %v1447 = vpop.f32.mrb[0].mxu0
        %v1448 = vadd.f32 %v1375, %v1447
        %v1449 = vpop.f32.mrb[0].mxu0
        %v1450 = vadd.f32 %v1377, %v1449
        %v1451 = vpop.f32.mrb[0].mxu0
        %v1452 = vadd.f32 %v1379, %v1451
        %1453 = vmatprep.mubr.bf16.mxu0 %v1301
        %1454 = vmatmul.mubr.bf16.gmra.mrb[0].mxu0 %v1300
        %v1455 = vpop.f32.mrb[0].mxu0
        %v1456 = vadd.f32 %v1383, %v1455
        %v1457 = vpop.f32.mrb[0].mxu0
        %v1458 = vadd.f32 %v1385, %v1457
        %v1459 = vpop.f32.mrb[0].mxu0
        %v1460 = vadd.f32 %v1387, %v1459
        %v1461 = vpop.f32.mrb[0].mxu0
        %v1462 = vadd.f32 %v1389, %v1461
        %1463 = vdwg.mxu0
        %v1464 = vmul.f32 %v1200, %v1200
        %v1465 = vmul.f32 %v1204, %v1204
        %v1466 = vmul.f32 %v1210, %v1210
        %v1467 = vmul.f32 %v1214, %v1214
        %v1468 = vmul.f32 %v1220, %v1220
        %v1469 = vmul.f32 %v1224, %v1224
        %v1470 = vmul.f32 %v1230, %v1230
        %v1471 = vmul.f32 %v1234, %v1234
        %v1472 = vmul.f32 %v1202, %v1202
        %v1473 = vmul.f32 %v1206, %v1206
        %v1474 = vmul.f32 %v1212, %v1212
        %v1475 = vmul.f32 %v1216, %v1216
        %v1476 = vmul.f32 %v1222, %v1222
        %v1477 = vmul.f32 %v1226, %v1226
        %v1478 = vmul.f32 %v1232, %v1232
        %v1479 = vmul.f32 %v1236, %v1236
        %v1480 = vadd.f32 %v1464, %v1472
        %v1481 = vadd.f32 %v1465, %v1473
        %v1482 = vadd.f32 %v1466, %v1474
        %v1483 = vadd.f32 %v1467, %v1475
        %v1484 = vadd.f32 %v1468, %v1476
        %v1485 = vadd.f32 %v1469, %v1477
        %v1486 = vadd.f32 %v1470, %v1478
        %v1487 = vadd.f32 %v1471, %v1479
        %v1488 = vrsqrt.pop %v1480
        %v1489 = vmul.f32 %v1480, %v1488
        %vm1490 = vcmp.eq.f32.partialorder %v1480, inf
        %v1491 = vsel %vm1490, %v1480, %v1489
        %vm1492 = vcmp.eq.f32.partialorder %v1480, 0.0
        %v1493 = vand.u32 %v1480, 2147483648
        %v1494 = vsel %vm1492, %v1493, %v1491
        %v1495 = vrsqrt.pop %v1481
        %v1496 = vmul.f32 %v1481, %v1495
        %vm1497 = vcmp.eq.f32.partialorder %v1481, inf
        %v1498 = vsel %vm1497, %v1481, %v1496
        %vm1499 = vcmp.eq.f32.partialorder %v1481, 0.0
        %v1500 = vand.u32 %v1481, 2147483648
        %v1501 = vsel %vm1499, %v1500, %v1498
        %v1502 = vrsqrt.pop %v1482
        %v1503 = vmul.f32 %v1482, %v1502
        %vm1504 = vcmp.eq.f32.partialorder %v1482, inf
        %v1505 = vsel %vm1504, %v1482, %v1503
        %vm1506 = vcmp.eq.f32.partialorder %v1482, 0.0
        %v1507 = vand.u32 %v1482, 2147483648
        %v1508 = vsel %vm1506, %v1507, %v1505
        %v1509 = vrsqrt.pop %v1483
        %v1510 = vmul.f32 %v1483, %v1509
        %vm1511 = vcmp.eq.f32.partialorder %v1483, inf
        %v1512 = vsel %vm1511, %v1483, %v1510
        %vm1513 = vcmp.eq.f32.partialorder %v1483, 0.0
        %v1514 = vand.u32 %v1483, 2147483648
        %v1515 = vsel %vm1513, %v1514, %v1512
        %v1516 = vrsqrt.pop %v1484
        %v1517 = vmul.f32 %v1484, %v1516
        %vm1518 = vcmp.eq.f32.partialorder %v1484, inf
        %v1519 = vsel %vm1518, %v1484, %v1517
        %vm1520 = vcmp.eq.f32.partialorder %v1484, 0.0
        %v1521 = vand.u32 %v1484, 2147483648
        %v1522 = vsel %vm1520, %v1521, %v1519
        %v1523 = vrsqrt.pop %v1485
        %v1524 = vmul.f32 %v1485, %v1523
        %vm1525 = vcmp.eq.f32.partialorder %v1485, inf
        %v1526 = vsel %vm1525, %v1485, %v1524
        %vm1527 = vcmp.eq.f32.partialorder %v1485, 0.0
        %v1528 = vand.u32 %v1485, 2147483648
        %v1529 = vsel %vm1527, %v1528, %v1526
        %v1530 = vrsqrt.pop %v1486
        %v1531 = vmul.f32 %v1486, %v1530
        %vm1532 = vcmp.eq.f32.partialorder %v1486, inf
        %v1533 = vsel %vm1532, %v1486, %v1531
        %vm1534 = vcmp.eq.f32.partialorder %v1486, 0.0
        %v1535 = vand.u32 %v1486, 2147483648
        %v1536 = vsel %vm1534, %v1535, %v1533
        %v1537 = vrsqrt.pop %v1487
        %v1538 = vmul.f32 %v1487, %v1537
        %vm1539 = vcmp.eq.f32.partialorder %v1487, inf
        %v1540 = vsel %vm1539, %v1487, %v1538
        %vm1541 = vcmp.eq.f32.partialorder %v1487, 0.0
        %v1542 = vand.u32 %v1487, 2147483648
        %v1543 = vsel %vm1541, %v1542, %v1540
        %v1544 = vmul.f32 %v1426, %v1426
        %v1545 = vmul.f32 %v1430, %v1430
        %v1546 = vmul.f32 %v1436, %v1436
        %v1547 = vmul.f32 %v1440, %v1440
        %v1548 = vmul.f32 %v1446, %v1446
        %v1549 = vmul.f32 %v1450, %v1450
        %v1550 = vmul.f32 %v1456, %v1456
        %v1551 = vmul.f32 %v1460, %v1460
        %v1552 = vmul.f32 %v1428, %v1428
        %v1553 = vmul.f32 %v1432, %v1432
        %v1554 = vmul.f32 %v1438, %v1438
        %v1555 = vmul.f32 %v1442, %v1442
        %v1556 = vmul.f32 %v1448, %v1448
        %v1557 = vmul.f32 %v1452, %v1452
        %v1558 = vmul.f32 %v1458, %v1458
        %v1559 = vmul.f32 %v1462, %v1462
        %v1560 = vadd.f32 %v1544, %v1552
        %v1561 = vadd.f32 %v1545, %v1553
        %v1562 = vadd.f32 %v1546, %v1554
        %v1563 = vadd.f32 %v1547, %v1555
        %v1564 = vadd.f32 %v1548, %v1556
        %v1565 = vadd.f32 %v1549, %v1557
        %v1566 = vadd.f32 %v1550, %v1558
        %v1567 = vadd.f32 %v1551, %v1559
        %v1568 = vrsqrt.pop %v1560
        %v1569 = vmul.f32 %v1560, %v1568
        %vm1570 = vcmp.eq.f32.partialorder %v1560, inf
        %v1571 = vsel %vm1570, %v1560, %v1569
        %vm1572 = vcmp.eq.f32.partialorder %v1560, 0.0
        %v1573 = vand.u32 %v1560, 2147483648
        %v1574 = vsel %vm1572, %v1573, %v1571
        %v1575 = vrsqrt.pop %v1561
        %v1576 = vmul.f32 %v1561, %v1575
        %vm1577 = vcmp.eq.f32.partialorder %v1561, inf
        %v1578 = vsel %vm1577, %v1561, %v1576
        %vm1579 = vcmp.eq.f32.partialorder %v1561, 0.0
        %v1580 = vand.u32 %v1561, 2147483648
        %v1581 = vsel %vm1579, %v1580, %v1578
        %v1582 = vrsqrt.pop %v1562
        %v1583 = vmul.f32 %v1562, %v1582
        %vm1584 = vcmp.eq.f32.partialorder %v1562, inf
        %v1585 = vsel %vm1584, %v1562, %v1583
        %vm1586 = vcmp.eq.f32.partialorder %v1562, 0.0
        %v1587 = vand.u32 %v1562, 2147483648
        %v1588 = vsel %vm1586, %v1587, %v1585
        %v1589 = vrsqrt.pop %v1563
        %v1590 = vmul.f32 %v1563, %v1589
        %vm1591 = vcmp.eq.f32.partialorder %v1563, inf
        %v1592 = vsel %vm1591, %v1563, %v1590
        %vm1593 = vcmp.eq.f32.partialorder %v1563, 0.0
        %v1594 = vand.u32 %v1563, 2147483648
        %v1595 = vsel %vm1593, %v1594, %v1592
        %v1596 = vrsqrt.pop %v1564
        %v1597 = vmul.f32 %v1564, %v1596
        %vm1598 = vcmp.eq.f32.partialorder %v1564, inf
        %v1599 = vsel %vm1598, %v1564, %v1597
        %vm1600 = vcmp.eq.f32.partialorder %v1564, 0.0
        %v1601 = vand.u32 %v1564, 2147483648
        %v1602 = vsel %vm1600, %v1601, %v1599
        %v1603 = vrsqrt.pop %v1565
        %v1604 = vmul.f32 %v1565, %v1603
        %vm1605 = vcmp.eq.f32.partialorder %v1565, inf
        %v1606 = vsel %vm1605, %v1565, %v1604
        %vm1607 = vcmp.eq.f32.partialorder %v1565, 0.0
        %v1608 = vand.u32 %v1565, 2147483648
        %v1609 = vsel %vm1607, %v1608, %v1606
        %v1610 = vrsqrt.pop %v1566
        %v1611 = vmul.f32 %v1566, %v1610
        %vm1612 = vcmp.eq.f32.partialorder %v1566, inf
        %v1613 = vsel %vm1612, %v1566, %v1611
        %vm1614 = vcmp.eq.f32.partialorder %v1566, 0.0
        %v1615 = vand.u32 %v1566, 2147483648
        %v1616 = vsel %vm1614, %v1615, %v1613
        %v1617 = vrsqrt.pop %v1567
        %v1618 = vmul.f32 %v1567, %v1617
        %vm1619 = vcmp.eq.f32.partialorder %v1567, inf
        %v1620 = vsel %vm1619, %v1567, %v1618
        %vm1621 = vcmp.eq.f32.partialorder %v1567, 0.0
        %v1622 = vand.u32 %v1567, 2147483648
        %v1623 = vsel %vm1621, %v1622, %v1620
        %v1624 = vsub.f32 %v1494, %v1574
        %v1625 = vsub.f32 %v1501, %v1581
        %v1626 = vsub.f32 %v1508, %v1588
        %v1627 = vsub.f32 %v1515, %v1595
        %v1628 = vsub.f32 %v1522, %v1602
        %v1629 = vsub.f32 %v1529, %v1609
        %v1630 = vsub.f32 %v1536, %v1616
        %v1631 = vsub.f32 %v1543, %v1623
        %v1632 = vand.u32 2147483647, %v1624
        %v1633 = vand.u32 2147483647, %v1625
        %v1634 = vand.u32 2147483647, %v1626
        %v1635 = vand.u32 2147483647, %v1627
        %v1636 = vand.u32 2147483647, %v1628
        %v1637 = vand.u32 2147483647, %v1629
        %v1638 = vand.u32 2147483647, %v1630
        %v1639 = vand.u32 2147483647, %v1631
        %v1640 = vadd.f32 %v1632, %v1633
        %v1641 = vadd.f32 %v1640, %v1634
        %v1642 = vadd.f32 %v1641, %v1635
        %v1643 = vadd.f32 %v1642, %v1636
        %v1644 = vadd.f32 %v1643, %v1637
        %v1645 = vadd.f32 %v1644, %v1638
        %v1646 = vadd.f32 %v1645, %v1639
        %1647 = vadd.xlane.f32.xlu0 %v1646
        %v1648 = vpop.xlane.xlu0 %1647
        %v1649 = vrot.slane %v1648, 4
        %v1650 = vadd.f32 %v1648, %v1649
        %v1651 = vrot.slane %v1650, 2
        %v1652 = vadd.f32 %v1650, %v1651
        %v1653 = vrot.slane %v1652, 1
        %v1654 = vadd.f32 %v1652, %v1653
        %s1655 = vtos %v1654
        %v1656 = vld [vmem:[%s256] sm:$0xff]
        %v1657 = vstv %s1655
        %v1658 = vadd.f32 %v1656, %v1657
        %1659 = vst [vmem:[%s256] sm:$0xff] %v1658
        %s1660 = sand.u32 %s116, 1
        %s1661 = scalar_lea.sflag [#allocation4], %s1660
        %s1662 = sand.u32 %s116, 1
        %s1663 = smul.addr %s1662, 8
        %s1664 = scalar_lea.vmem [#allocation8], %s1663
        // Predicated region
        $region49: #{tpu_custom_call.1} parent=31 // pred_check
          %p1665 = pneg %p126
        $region50: #{tpu_custom_call.1} parent=31 // pred_check_branch
          %1667 = sbr.rel (%p1665) target = $region52
        $region51: #{tpu_custom_call.1} parent=31 // pred_region
          %s1669 = ssub.s32 128, 128
          %1670 = vsyncadd %s1661, %s1669
          %s1671 = smul.addr %s27, 128
          %s1672 = scalar_lea.hbm %s3, %s1671
          %s1674 = sshll.u32 %s1664, 4
          %s1675 = int_to_ptr.vmem [resolvable:$true] %s1674
          %1677 = dma.vmem_to_hbm [thread:$0]  %s1675, 128, %s1672, %s1661
        $region52: #{tpu_custom_call.1} parent=31 // pred_fallthru
          _
      $region32: #{tpu_custom_call.1} parent=5 // pred_fallthru
        _
      %p1678 = scmp.le.s32.totalorder 2, %s18
      // Predicated region
      $region53: #{tpu_custom_call.1} parent=5 // pred_check
        %p1679 = pneg %p1678
      $region54: #{tpu_custom_call.1} parent=5 // pred_check_branch
        %1681 = sbr.rel (%p1679) target = $region56
      $region55: #{tpu_custom_call.1} parent=5 // pred_region
        %s1682 = ssub.s32 %s18, 2
        // Predicated region
        $region57: #{tpu_custom_call.1} parent=55 // pred_check
          %p1683 = pneg %p132
        $region58: #{tpu_custom_call.1} parent=55 // pred_check_branch
          %1685 = sbr.rel (%p1683) target = $region60
        $region59: #{tpu_custom_call.1} parent=55 // pred_region
          %s1686 = sand.u32 %s117, 1
          %s1687 = scalar_lea.sflag [#allocation4], %s1686
          %s1688 = sand.u32 %s117, 1
          %s1689 = smul.addr %s1688, 8
          %s1690 = scalar_lea.vmem [#allocation8], %s1689
          %1691 = dma.done %s1687, 128
        $region60: #{tpu_custom_call.1} parent=55 // pred_fallthru
          _
      $region56: #{tpu_custom_call.1} parent=5 // pred_fallthru
        _
    $region6: #{tpu_custom_call.1} parent=1 // loop_footer
      %s22 = sadd.s32 1, %s18
    $region7: #{tpu_custom_call.1} parent=1 // loop_footer_branch
      %17 = sbr.rel target = $region3
    $region8: #{tpu_custom_call.1} parent=1 // loop_exit
      _
    %1692 = vsyncpa [#allocation3], 1
    %s1693 = scalar_lea.sflag [#allocation3], 1
    %1694 = vsyncpa %s1693, 1
    %1695 = vsyncpa [#allocation6], 1
    %s1696 = scalar_lea.sflag [#allocation6], 1
    %1697 = vsyncpa %s1696, 1
    %1698 = vsyncpa [#allocation4], 1
    %s1699 = scalar_lea.sflag [#allocation4], 1
    %1700 = vsyncpa %s1699, 1

</llo_original>
